<compile_context>
chip_gen: v7x
topology: tpu7x:2x2x1
jax: 0.10.0
libtpu: 0.0.40
codegen_flags: <defaults>
</compile_context>

<pallas_src>
import functools

import jax
import jax.numpy as jnp
from jax.experimental import pallas as pl
from jax.experimental.pallas import tpu as pltpu


def _round_up(a, b):
    return (a + b - 1) // b * b


def _padded_vmem_bytes(rows, cols, dtype):
    """Approximate VMEM bytes of a (rows, cols) buffer incl. (sublane, lane) padding."""
    itemsize = jnp.dtype(dtype).itemsize
    sub = 8 * (4 // itemsize)          # 8 rows for f32 tiles, 16 for bf16 (packed)
    return _round_up(max(int(rows), 1), sub) * _round_up(max(int(cols), 1), 128) * itemsize


# ----------------------------------------------------------------------------
# Pallas kernel: one (n, od, row-tile) step -> single big-K matmul.
# ----------------------------------------------------------------------------
def _conv3d_fused_kernel(*refs, KD, KH, KW, S, Ws, Tm, ext_rows, activation):
    # refs[:KD] : KD x (S*S, Ls, Cin) bf16 depth planes od*S+kd, resident
    # refs[KD]  : (KD*KH*KW*Cin, Cout) bf16 weight, resident
    # refs[KD+1]: (1, Cout) f32 bias, resident
    # refs[KD+2]: (Tm, Cout) f32 output row-tile
    x_refs = refs[:KD]
    w_ref, b_ref, o_ref = refs[KD], refs[KD + 1], refs[KD + 2]

    # Row-tile start; Tm is a multiple of 8 so the dynamic load start is 8-aligned.
    m0 = pl.multiple_of(pl.program_id(2) * Tm, 8)

    pieces = []
    for kd in range(KD):
        xk = x_refs[kd]
        ext = {}  # one aligned dynamic window per stride phase of this depth plane
        for kh in range(KH):
            for kw in range(KW):
                ph = (kh % S) * S + (kw % S)          # static sub-plane (stride phase)
                if ph not in ext:
                    ext[ph] = xk[ph, pl.ds(m0, ext_rows), :]    # (ext_rows, Cin)
                base = (kh // S) * Ws + (kw // S)     # static row offset within window
                pieces.append(ext[ph][base:base + Tm, :])       # (Tm, Cin), static slice
    # (Tm, KD*KH*KW*Cin) patch tile -> single MXU matmul with large contraction dim.
    lhs = pieces[0] if len(pieces) == 1 else jnp.concatenate(pieces, axis=-1)

    out = jnp.dot(lhs, w_ref[...], preferred_element_type=jnp.float32)
    out = out + b_ref[...]                            # f32 bias add
    if activation == "relu":
        out = jnp.maximum(out, 0.0)
    elif activation == "lrelu":
        out = jnp.where(out >= 0.0, out, 0.2 * out)   # MUNIT LeakyReLU(0.2)
    elif activation == "tanh":
        out = jnp.tanh(out)
    # activation == 'none': pass through
    o_ref[...] = out.astype(o_ref.dtype)


# ----------------------------------------------------------------------------
# Conv3DBlock forward wrapper (layout plumbing in JAX, hot path in Pallas)
# ----------------------------------------------------------------------------
def conv3d_block_forward(x_ncdhw, weight_oidhw, bias, *, stride, padding,
                         activation="relu", compute_dtype=jnp.bfloat16,
                         tile_rows=512):
    """Forward of Conv3DBlock with norm='none'.

    x_ncdhw:      (N, Cin, D, H, W)        float32 (PyTorch NCDHW layout)
    weight_oidhw: (Cout, Cin, KD, KH, KW)
    bias:         (Cout,)
    returns:      (N, Cout, Do, Ho, Wo)    float32
    """
    if activation not in ("relu", "lrelu", "tanh", "none"):
        raise NotImplementedError(f"activation '{activation}' not implemented")

    N, Cin, D, H, W = x_ncdhw.shape
    Cout, Cin_w, KD, KH, KW = weight_oidhw.shape
    assert Cin_w == Cin
    S, P = int(stride), int(padding)

    Dp, Hp, Wp = D + 2 * P, H + 2 * P, W + 2 * P
    Do = (Dp - KD) // S + 1
    Ho = (Hp - KH) // S + 1
    Wo = (Wp - KW) // S + 1

    # Stride-phase decomposition: S*S sub-planes of (Hs, Ws) each; every tap read
    # becomes a contiguous row window of a sub-plane (exact for any stride).
    SS = S * S
    Ws = -(-Wp // S)
    Hs0 = -(-Hp // S)

    # "wide" rows per (n, od) plane: m = oh*Ws + ow; only ow < Wo is kept.
    Mw = Ho * Ws
    Tm = min(_round_up(Mw, 8), _round_up(int(tile_rows), 8))   # rows per output tile
    R = -(-Mw // Tm)
    Mw_pad = R * Tm

    base_max = ((KH - 1) // S) * Ws + (KW - 1) // S
    ext_rows = _round_up(Tm + base_max, 8)                     # per-phase load window
    needed = (R - 1) * Tm + ext_rows                           # flat rows required
    Hs = max(Hs0, -(-needed // Ws))
    Ls = Hs * Ws
    Ktot = KD * KH * KW * Cin

    # ---- input: NCDHW -> NDHWC bf16; conv pad + phase pad + tail pad in ONE pad;
    # split into S*S stride-phase sub-planes, flatten each to Ls rows.
    x = jnp.transpose(x_ncdhw, (0, 2, 3, 4, 1)).astype(compute_dtype)
    x = jnp.pad(x, ((0, 0), (P, P),
                    (P, Hs * S - H - P), (P, Ws * S - W - P), (0, 0)))
    x = x.reshape(N, Dp, Hs, S, Ws, S, Cin)
    x = jnp.transpose(x, (0, 1, 3, 5, 2, 4, 6))                # (N,Dp,S,S,Hs,Ws,Cin)
    x = x.reshape(N, Dp, SS, Ls, Cin)

    # ---- weight: OIDHW -> (KD*KH*KW*Cin, Cout) bf16 ; bias -> (1, Cout) f32 -----
    wt = jnp.transpose(weight_oidhw, (2, 3, 4, 1, 0)).reshape(Ktot, Cout)
    wt = wt.astype(compute_dtype)
    b2 = bias.reshape(1, Cout).astype(jnp.float32)

    kernel = functools.partial(
        _conv3d_fused_kernel, KD=KD, KH=KH, KW=KW, S=S, Ws=Ws, Tm=Tm,
        ext_rows=ext_rows, activation=activation)

    # ---- explicit VMEM budget (double-buffered blocks + matmul temporaries) -----
    est = (2 * KD * SS * _padded_vmem_bytes(Ls, Cin, compute_dtype)        # inputs
           + 2 * _padded_vmem_bytes(Ktot, Cout, compute_dtype)             # weight
           + 2 * _padded_vmem_bytes(1, Cout, jnp.float32)                  # bias
           + 2 * _padded_vmem_bytes(Tm, Cout, jnp.float32)                 # out tiles
           + KD * SS * _padded_vmem_bytes(ext_rows, Cin, compute_dtype)    # windows
           + _padded_vmem_bytes(Tm, Ktot, compute_dtype)                   # patch tile
           + _padded_vmem_bytes(Tm, max(Cout, 128), jnp.float32))          # dot result
    # Cap below 64 MiB so the same budget is valid per-TensorCore on v7x.
    vmem_limit = int(min(60 * 1024 * 1024, max(32 * 1024 * 1024, 2 * est)))

    itemsize = jnp.dtype(compute_dtype).itemsize
    cost = pl.CostEstimate(
        flops=2 * N * Do * Mw_pad * Ktot * Cout,
        transcendentals=(N * Do * Mw_pad * Cout) if activation == "tanh" else 0,
        bytes_accessed=(N * Do * KD * SS * Ls * Cin * itemsize   # input (KD depth re-reads)
                        + Ktot * Cout * itemsize + Cout * 4      # resident weight + bias
                        + N * Do * Mw_pad * Cout * 4),           # f32, Cout-only output
    )

    # KD copies of the same input array: each grid step gets the KD depth planes
    # od*S + kd resident in VMEM (reused across the row-tile axis r).
    x_specs = [
        pl.BlockSpec((None, None, SS, Ls, Cin),
                     lambda n, od, r, _kd=kd: (n, od * S + _kd, 0, 0, 0))
        for kd in range(KD)
    ]

    y = pl.pallas_call(
        kernel,
        out_shape=jax.ShapeDtypeStruct((N, Do, Mw_pad, Cout), jnp.float32),
        grid_spec=pltpu.PrefetchScalarGridSpec(
            num_scalar_prefetch=0,
            grid=(N, Do, R),
            in_specs=x_specs + [
                # full weight / bias, constant block index -> fetched once, resident
                pl.BlockSpec((Ktot, Cout), lambda n, od, r: (0, 0)),
                pl.BlockSpec((1, Cout), lambda n, od, r: (0, 0)),
            ],
            out_specs=pl.BlockSpec((None, None, Tm, Cout),
                                   lambda n, od, r: (n, od, r, 0)),
        ),
        compiler_params=pltpu.CompilerParams(
            dimension_semantics=("parallel", "parallel", "arbitrary"),
            vmem_limit_bytes=vmem_limit),
        cost_estimate=cost,
    )(*([x] * KD), wt, b2)

    # wide plane -> (N, Do, Ho, Ws, Cout); keep valid Wo columns; back to NCDHW.
    y = y[:, :, :Ho * Ws, :].reshape(N, Do, Ho, Ws, Cout)[:, :, :, :Wo, :]
    return jnp.transpose(y, (0, 4, 1, 2, 3)).astype(x_ncdhw.dtype)


# ----------------------------------------------------------------------------
# main
# ----------------------------------------------------------------------------
if __name__ == "__main__":
    key = jax.random.PRNGKey(0)
    k_x, k_w, k_b = jax.random.split(key, 3)

    # Shapes consistent with Conv3DBlock(input_dim=4, output_dim=8,
    # kernel_size=3, stride=1, padding=1, norm='none', activation='relu')
    N, Cin, Cout = 2, 4, 8
    D = H = W = 8
    KS, STRIDE, PAD = 3, 1, 1

    x = jax.random.normal(k_x, (N, Cin, D, H, W), dtype=jnp.float32)
    weight = jax.random.normal(k_w, (Cout, Cin, KS, KS, KS),
                               dtype=jnp.float32) * 0.05
    bias = jax.random.uniform(k_b, (Cout,), dtype=jnp.float32,
                              minval=-0.1, maxval=0.1)

    fwd = jax.jit(functools.partial(conv3d_block_forward, stride=STRIDE,
                                    padding=PAD, activation="relu"))
    out = jax.block_until_ready(fwd(x, weight, bias))

    # Reference: same bf16-rounded operands (kernel uses bf16 MXU inputs with
    # f32 accumulation), f32 conv + bias + ReLU.
    x_r = x.astype(jnp.bfloat16).astype(jnp.float32)
    w_r = weight.astype(jnp.bfloat16).astype(jnp.float32)
    ref = jax.lax.conv_general_dilated(
        x_r, w_r,
        window_strides=(STRIDE,) * 3,
        padding=[(PAD, PAD)] * 3,
        dimension_numbers=("NCDHW", "OIDHW", "NCDHW"),
        precision=jax.lax.Precision.HIGHEST,
    ) + bias.reshape(1, Cout, 1, 1, 1)
    ref = jnp.maximum(ref, 0.0)

    assert out.shape == ref.shape, (out.shape, ref.shape)
    max_err = float(jnp.max(jnp.abs(out - ref)))
    assert max_err < 1e-2, max_err

    print("KERNEL_OK")
</pallas_src>

<mosaic_0001>
module attributes {stable_mosaic.version = 11 : i64} {
  func.func @_conv3d_fused_kernel(%arg0: i32, %arg1: i32, %arg2: i32, %arg3: memref<1x1x1x110x4xbf16, #tpu.memory_space<vmem>>, %arg4: memref<1x1x1x110x4xbf16, #tpu.memory_space<vmem>>, %arg5: memref<1x1x1x110x4xbf16, #tpu.memory_space<vmem>>, %arg6: memref<108x8xbf16, #tpu.memory_space<vmem>>, %arg7: memref<1x8xf32, #tpu.memory_space<vmem>>, %arg8: memref<1x1x80x8xf32, #tpu.memory_space<vmem>>) attributes {dimension_semantics = [#tpu.dimension_semantics<parallel>, #tpu.dimension_semantics<parallel>, #tpu.dimension_semantics<arbitrary>], iteration_bounds = array<i64: 2, 8, 1>, scalar_prefetch = 0 : i64, scratch_operands = 0 : i64, tpu.core_type = #tpu.core_type<tc>, window_params = [{transform_indices = @transform_0, window_bounds = array<i64: 1, 1, 1, 110, 4>}, {transform_indices = @transform_1, window_bounds = array<i64: 1, 1, 1, 110, 4>}, {transform_indices = @transform_2, window_bounds = array<i64: 1, 1, 1, 110, 4>}, {pipeline_mode = #tpu.pipeline_mode<synchronous>, transform_indices = @transform_3, window_bounds = array<i64: 108, 8>}, {pipeline_mode = #tpu.pipeline_mode<synchronous>, transform_indices = @transform_4, window_bounds = array<i64: 1, 8>}, {transform_indices = @transform_5, window_bounds = array<i64: 1, 1, 80, 8>}]} {
    %c80_i32 = arith.constant 80 : i32
    %0 = arith.muli %arg2, %c80_i32 : i32
    %1 = tpu.assume_multiple %0, 8 : i32
    %c0 = arith.constant 0 : index
    %c0_0 = arith.constant 0 : index
    %c0_1 = arith.constant 0 : index
    %2 = arith.index_cast %1 : i32 to index
    %c0_2 = arith.constant 0 : index
    %3 = vector.load %arg3[%c0, %c0_0, %c0_1, %2, %c0_2] : memref<1x1x1x110x4xbf16, #tpu.memory_space<vmem>>, vector<1x1x1x104x4xbf16>
    %4 = vector.shape_cast %3 : vector<1x1x1x104x4xbf16> to vector<104x4xbf16>
    %5 = vector.extract_strided_slice %4 {offsets = [0, 0], sizes = [80, 4], strides = [1, 1]} : vector<104x4xbf16> to vector<80x4xbf16>
    %6 = vector.extract_strided_slice %4 {offsets = [1, 0], sizes = [80, 4], strides = [1, 1]} : vector<104x4xbf16> to vector<80x4xbf16>
    %7 = vector.extract_strided_slice %4 {offsets = [2, 0], sizes = [80, 4], strides = [1, 1]} : vector<104x4xbf16> to vector<80x4xbf16>
    %8 = vector.extract_strided_slice %4 {offsets = [10, 0], sizes = [80, 4], strides = [1, 1]} : vector<104x4xbf16> to vector<80x4xbf16>
    %9 = vector.extract_strided_slice %4 {offsets = [11, 0], sizes = [80, 4], strides = [1, 1]} : vector<104x4xbf16> to vector<80x4xbf16>
    %10 = vector.extract_strided_slice %4 {offsets = [12, 0], sizes = [80, 4], strides = [1, 1]} : vector<104x4xbf16> to vector<80x4xbf16>
    %11 = vector.extract_strided_slice %4 {offsets = [20, 0], sizes = [80, 4], strides = [1, 1]} : vector<104x4xbf16> to vector<80x4xbf16>
    %12 = vector.extract_strided_slice %4 {offsets = [21, 0], sizes = [80, 4], strides = [1, 1]} : vector<104x4xbf16> to vector<80x4xbf16>
    %13 = vector.extract_strided_slice %4 {offsets = [22, 0], sizes = [80, 4], strides = [1, 1]} : vector<104x4xbf16> to vector<80x4xbf16>
    %c0_3 = arith.constant 0 : index
    %c0_4 = arith.constant 0 : index
    %c0_5 = arith.constant 0 : index
    %14 = arith.index_cast %1 : i32 to index
    %c0_6 = arith.constant 0 : index
    %15 = vector.load %arg4[%c0_3, %c0_4, %c0_5, %14, %c0_6] : memref<1x1x1x110x4xbf16, #tpu.memory_space<vmem>>, vector<1x1x1x104x4xbf16>
    %16 = vector.shape_cast %15 : vector<1x1x1x104x4xbf16> to vector<104x4xbf16>
    %17 = vector.extract_strided_slice %16 {offsets = [0, 0], sizes = [80, 4], strides = [1, 1]} : vector<104x4xbf16> to vector<80x4xbf16>
    %18 = vector.extract_strided_slice %16 {offsets = [1, 0], sizes = [80, 4], strides = [1, 1]} : vector<104x4xbf16> to vector<80x4xbf16>
    %19 = vector.extract_strided_slice %16 {offsets = [2, 0], sizes = [80, 4], strides = [1, 1]} : vector<104x4xbf16> to vector<80x4xbf16>
    %20 = vector.extract_strided_slice %16 {offsets = [10, 0], sizes = [80, 4], strides = [1, 1]} : vector<104x4xbf16> to vector<80x4xbf16>
    %21 = vector.extract_strided_slice %16 {offsets = [11, 0], sizes = [80, 4], strides = [1, 1]} : vector<104x4xbf16> to vector<80x4xbf16>
    %22 = vector.extract_strided_slice %16 {offsets = [12, 0], sizes = [80, 4], strides = [1, 1]} : vector<104x4xbf16> to vector<80x4xbf16>
    %23 = vector.extract_strided_slice %16 {offsets = [20, 0], sizes = [80, 4], strides = [1, 1]} : vector<104x4xbf16> to vector<80x4xbf16>
    %24 = vector.extract_strided_slice %16 {offsets = [21, 0], sizes = [80, 4], strides = [1, 1]} : vector<104x4xbf16> to vector<80x4xbf16>
    %25 = vector.extract_strided_slice %16 {offsets = [22, 0], sizes = [80, 4], strides = [1, 1]} : vector<104x4xbf16> to vector<80x4xbf16>
    %c0_7 = arith.constant 0 : index
    %c0_8 = arith.constant 0 : index
    %c0_9 = arith.constant 0 : index
    %26 = arith.index_cast %1 : i32 to index
    %c0_10 = arith.constant 0 : index
    %27 = vector.load %arg5[%c0_7, %c0_8, %c0_9, %26, %c0_10] : memref<1x1x1x110x4xbf16, #tpu.memory_space<vmem>>, vector<1x1x1x104x4xbf16>
    %28 = vector.shape_cast %27 : vector<1x1x1x104x4xbf16> to vector<104x4xbf16>
    %29 = vector.extract_strided_slice %28 {offsets = [0, 0], sizes = [80, 4], strides = [1, 1]} : vector<104x4xbf16> to vector<80x4xbf16>
    %30 = vector.extract_strided_slice %28 {offsets = [1, 0], sizes = [80, 4], strides = [1, 1]} : vector<104x4xbf16> to vector<80x4xbf16>
    %31 = vector.extract_strided_slice %28 {offsets = [2, 0], sizes = [80, 4], strides = [1, 1]} : vector<104x4xbf16> to vector<80x4xbf16>
    %32 = vector.extract_strided_slice %28 {offsets = [10, 0], sizes = [80, 4], strides = [1, 1]} : vector<104x4xbf16> to vector<80x4xbf16>
    %33 = vector.extract_strided_slice %28 {offsets = [11, 0], sizes = [80, 4], strides = [1, 1]} : vector<104x4xbf16> to vector<80x4xbf16>
    %34 = vector.extract_strided_slice %28 {offsets = [12, 0], sizes = [80, 4], strides = [1, 1]} : vector<104x4xbf16> to vector<80x4xbf16>
    %35 = vector.extract_strided_slice %28 {offsets = [20, 0], sizes = [80, 4], strides = [1, 1]} : vector<104x4xbf16> to vector<80x4xbf16>
    %36 = vector.extract_strided_slice %28 {offsets = [21, 0], sizes = [80, 4], strides = [1, 1]} : vector<104x4xbf16> to vector<80x4xbf16>
    %37 = vector.extract_strided_slice %28 {offsets = [22, 0], sizes = [80, 4], strides = [1, 1]} : vector<104x4xbf16> to vector<80x4xbf16>
    %38 = tpu.concatenate %5, %6, %7, %8, %9, %10, %11, %12, %13, %17, %18, %19, %20, %21, %22, %23 in 1 : vector<80x4xbf16>, vector<80x4xbf16>, vector<80x4xbf16>, vector<80x4xbf16>, vector<80x4xbf16>, vector<80x4xbf16>, vector<80x4xbf16>, vector<80x4xbf16>, vector<80x4xbf16>, vector<80x4xbf16>, vector<80x4xbf16>, vector<80x4xbf16>, vector<80x4xbf16>, vector<80x4xbf16>, vector<80x4xbf16>, vector<80x4xbf16> -> vector<80x64xbf16>
    %39 = tpu.concatenate %24, %25, %29, %30, %31, %32, %33, %34, %35, %36, %37 in 1 : vector<80x4xbf16>, vector<80x4xbf16>, vector<80x4xbf16>, vector<80x4xbf16>, vector<80x4xbf16>, vector<80x4xbf16>, vector<80x4xbf16>, vector<80x4xbf16>, vector<80x4xbf16>, vector<80x4xbf16>, vector<80x4xbf16> -> vector<80x44xbf16>
    %40 = tpu.concatenate %38, %39 in 1 : vector<80x64xbf16>, vector<80x44xbf16> -> vector<80x108xbf16>
    %c0_11 = arith.constant 0 : index
    %c0_12 = arith.constant 0 : index
    %41 = vector.load %arg6[%c0_11, %c0_12] : memref<108x8xbf16, #tpu.memory_space<vmem>>, vector<108x8xbf16>
    %cst = arith.constant dense<0.000000e+00> : vector<80x8xf32>
    %42 = tpu.matmul %40, %41, %cst {dimension_numbers = #tpu.dot_dimension_numbers<[1], [0], [0], [1], [0, 0, 1, 1], [], []>} : vector<80x108xbf16>, vector<108x8xbf16>, vector<80x8xf32> -> vector<80x8xf32>
    %c0_13 = arith.constant 0 : index
    %c0_14 = arith.constant 0 : index
    %43 = vector.load %arg7[%c0_13, %c0_14] : memref<1x8xf32, #tpu.memory_space<vmem>>, vector<1x8xf32>
    %44 = vector.broadcast %43 : vector<1x8xf32> to vector<80x8xf32>
    %45 = arith.addf %42, %44 : vector<80x8xf32>
    %cst_15 = arith.constant 0.000000e+00 : f32
    %46 = vector.broadcast %cst_15 : f32 to vector<80x8xf32>
    %47 = arith.maximumf %45, %46 : vector<80x8xf32>
    %c0_16 = arith.constant 0 : index
    %c0_17 = arith.constant 0 : index
    %c0_18 = arith.constant 0 : index
    %c0_19 = arith.constant 0 : index
    %48 = vector.load %arg8[%c0_16, %c0_17, %c0_18, %c0_19] : memref<1x1x80x8xf32, #tpu.memory_space<vmem>>, vector<1x1x80x8xf32>
    %49 = vector.shape_cast %48 : vector<1x1x80x8xf32> to vector<80x8xf32>
    %50 = vector.shape_cast %47 : vector<80x8xf32> to vector<1x1x80x8xf32>
    tpu.vector_store %arg8[%c0_16, %c0_17, %c0_18, %c0_19], %50 {strides = array<i32>} : memref<1x1x80x8xf32, #tpu.memory_space<vmem>>, vector<1x1x80x8xf32>,
    return
  }
  func.func @transform_0(%arg0: i32, %arg1: i32, %arg2: i32) -> (i32, i32, i32, i32, i32) {
    %c1_i32 = arith.constant 1 : i32
    %0 = arith.muli %arg1, %c1_i32 : i32
    %c0_i32 = arith.constant 0 : i32
    %1 = arith.addi %0, %c0_i32 : i32
    %c0_i32_0 = arith.constant 0 : i32
    %c0_i32_1 = arith.constant 0 : i32
    %c0_i32_2 = arith.constant 0 : i32
    %c0_i32_3 = arith.constant 0 : i32
    return %arg0, %1, %c0_i32_0, %c0_i32_1, %c0_i32_2 : i32, i32, i32, i32, i32
  }
  func.func @transform_1(%arg0: i32, %arg1: i32, %arg2: i32) -> (i32, i32, i32, i32, i32) {
    %c1_i32 = arith.constant 1 : i32
    %0 = arith.muli %arg1, %c1_i32 : i32
    %c1_i32_0 = arith.constant 1 : i32
    %1 = arith.addi %0, %c1_i32_0 : i32
    %c0_i32 = arith.constant 0 : i32
    %c0_i32_1 = arith.constant 0 : i32
    %c0_i32_2 = arith.constant 0 : i32
    %c0_i32_3 = arith.constant 0 : i32
    return %arg0, %1, %c0_i32, %c0_i32_1, %c0_i32_2 : i32, i32, i32, i32, i32
  }
  func.func @transform_2(%arg0: i32, %arg1: i32, %arg2: i32) -> (i32, i32, i32, i32, i32) {
    %c1_i32 = arith.constant 1 : i32
    %0 = arith.muli %arg1, %c1_i32 : i32
    %c2_i32 = arith.constant 2 : i32
    %1 = arith.addi %0, %c2_i32 : i32
    %c0_i32 = arith.constant 0 : i32
    %c0_i32_0 = arith.constant 0 : i32
    %c0_i32_1 = arith.constant 0 : i32
    %c0_i32_2 = arith.constant 0 : i32
    return %arg0, %1, %c0_i32, %c0_i32_0, %c0_i32_1 : i32, i32, i32, i32, i32
  }
  func.func @transform_3(%arg0: i32, %arg1: i32, %arg2: i32) -> (i32, i32) {
    %c0_i32 = arith.constant 0 : i32
    %c0_i32_0 = arith.constant 0 : i32
    %c0_i32_1 = arith.constant 0 : i32
    return %c0_i32, %c0_i32_0 : i32, i32
  }
  func.func @transform_4(%arg0: i32, %arg1: i32, %arg2: i32) -> (i32, i32) {
    %c0_i32 = arith.constant 0 : i32
    %c0_i32_0 = arith.constant 0 : i32
    %c0_i32_1 = arith.constant 0 : i32
    return %c0_i32, %c0_i32_0 : i32, i32
  }
  func.func @transform_5(%arg0: i32, %arg1: i32, %arg2: i32) -> (i32, i32, i32, i32) {
    %c0_i32 = arith.constant 0 : i32
    %c0_i32_0 = arith.constant 0 : i32
    return %arg0, %arg1, %arg2, %c0_i32 : i32, i32, i32, i32
  }
}

</mosaic_0001>

<llo_original>
// kernel: conv3d_block_forward.1
$region0: #{conv3d_block_forward.1}
  #allocation0 [shape = 'u32[]', space=smem, size = 0x4, offset = 0x4, fixed_abs, tag = 'smem constant byte address 0x4 - core index']
  #allocation1 [shape = 'u32[144,128]{1,0:T(1,128)}', space=vmem, size = 0x12000, scoped, tag = 'internal scratch']
  %s0 = inlined_call_operand.vmem [shape: bf16[2,10,1,110,4], index: 0, kind: input, shape index: {}, may-alias: {0,1,2}]
  %s1 = inlined_call_operand.vmem [shape: bf16[2,10,1,110,4], index: 1, kind: input, shape index: {}, may-alias: {0,1,2}]
  %s2 = inlined_call_operand.vmem [shape: bf16[2,10,1,110,4], index: 2, kind: input, shape index: {}, may-alias: {0,1,2}]
  %s3 = inlined_call_operand.vmem [shape: bf16[108,8], index: 3, kind: input, shape index: {}]
  %s4 = inlined_call_operand.vmem [shape: f32[1,8], index: 4, kind: input, shape index: {}]
  %s5 = inlined_call_operand.vmem [shape: f32[2,8,80,8], index: 5, kind: output, shape index: {}]
  %s6 = sld [smem:[#allocation0]]
  $region53: #{conv3d_block_forward.1} parent=0
    _
  %s8 = ssub.s32 1, %s6
  %s9 = scalar_select 0, %s8, %s6
  loop: start=0, step=1, limit=18
  $region2: #{conv3d_block_forward.1} parent=0 // loop_pre_header
    _
  $region3: #{conv3d_block_forward.1} parent=0 // loop_header
    %s11 = sphi 0, %s15
    %p12 = scmp.ge.s32.totalorder %s11, 18
    %s18 = sphi 0, %s37
    %s19 = sphi 0, %s33
    %s20 = sphi 0, %s29
    %s21 = sphi 0, %s18
    %s22 = sphi 0, %s19
    %s23 = sphi 0, %s20
    %s24 = sphi 0, %s21
    %s25 = sphi 0, %s22
    %s26 = sphi 0, %s23
    %s42 = sphi 0, %s44
    %s45 = sphi 0, %s42
    %s46 = sphi 0, %s45
    %s62 = sphi 0, %s46
    %s72 = sphi 0, %s74
    %s75 = sphi 0, %s72
    %s76 = sphi 0, %s75
    %s92 = sphi 0, %s76
    %s102 = sphi 0, %s104
    %s105 = sphi 0, %s102
    %s106 = sphi 0, %s105
    %s122 = sphi 0, %s106
    %s126 = sphi 0, %s126
    %s128 = sphi 0, %s126
    %s129 = sphi 0, %s128
    %s143 = sphi 0, %s129
    %s147 = sphi 0, %s147
    %s149 = sphi 0, %s147
    %s150 = sphi 0, %s149
    %s164 = sphi 0, %s150
    %s174 = sphi 0, %s176
    %s177 = sphi 0, %s174
    %s178 = sphi 0, %s177
    %s194 = sphi 0, %s178
  $region4: #{conv3d_block_forward.1} parent=0 // loop_header_branch
    %14 = sbr.rel (%p12) target = $region8
  $region5: #{conv3d_block_forward.1} parent=0 // loop_body
    %s16 = ssub.s32 %s11, 1
    %s17 = ssub.s32 %s11, 2
    %s27 = sadd.s32 1, %s20
    %p28 = scmp.ge.s32.totalorder %s27, 1
    %s29 = scalar_select %p28, 0, %s27
    %s30 = sadd.s32 1, %s19
    %s31 = scalar_select %p28, %s30, %s19
    %p32 = scmp.ge.s32.totalorder %s31, 8
    %s33 = scalar_select %p32, 0, %s31
    %s34 = sadd.s32 1, %s18
    %s35 = scalar_select %p32, %s34, %s18
    %p36 = scmp.ge.s32.totalorder %s35, 2
    %s37 = scalar_select %p36, 0, %s35
    %s38 = ssub.s32 %s18, %s37
    %s39 = ssub.s32 %s19, %s33
    %s40 = sor.u32 %s38, %s39
    %p41 = scmp.eq.s32.totalorder %s40, 0
    %s43 = sadd.s32 %s42, 1
    %s44 = scalar_select %p41, %s42, %s43
    %p47 = pneg %p41
    %p48 = scmp.eq.s32.totalorder %s11, 15
    %p49 = por %p47, %p48
    %p50 = scmp.ne.s32.totalorder %s42, %s45
    %p51 = scmp.eq.s32.totalorder %s11, 0
    %p52 = por %p50, %p51
    %p53 = scmp.ne.s32.totalorder %s42, %s45
    %p54 = scmp.eq.s32.totalorder %s16, 15
    %p55 = por %p53, %p54
    %p56 = scmp.ne.s32.totalorder %s45, %s46
    %p57 = scmp.eq.s32.totalorder %s16, 0
    %p58 = por %p56, %p57
    %p59 = scmp.ne.s32.totalorder %s45, %s46
    %p60 = scmp.eq.s32.totalorder %s17, 15
    %p61 = por %p59, %p60
    %p63 = scmp.ne.s32.totalorder %s46, %s62
    %p64 = scmp.eq.s32.totalorder %s17, 0
    %p65 = por %p63, %p64
    %s66 = sadd.s32 %s19, 1
    %s67 = sadd.s32 %s33, 1
    %s68 = ssub.s32 %s18, %s37
    %s69 = ssub.s32 %s66, %s67
    %s70 = sor.u32 %s68, %s69
    %p71 = scmp.eq.s32.totalorder %s70, 0
    %s73 = sadd.s32 %s72, 1
    %s74 = scalar_select %p71, %s72, %s73
    %p77 = pneg %p71
    %p78 = scmp.eq.s32.totalorder %s11, 15
    %p79 = por %p77, %p78
    %p80 = scmp.ne.s32.totalorder %s72, %s75
    %p81 = scmp.eq.s32.totalorder %s11, 0
    %p82 = por %p80, %p81
    %p83 = scmp.ne.s32.totalorder %s72, %s75
    %p84 = scmp.eq.s32.totalorder %s16, 15
    %p85 = por %p83, %p84
    %p86 = scmp.ne.s32.totalorder %s75, %s76
    %p87 = scmp.eq.s32.totalorder %s16, 0
    %p88 = por %p86, %p87
    %p89 = scmp.ne.s32.totalorder %s75, %s76
    %p90 = scmp.eq.s32.totalorder %s17, 15
    %p91 = por %p89, %p90
    %p93 = scmp.ne.s32.totalorder %s76, %s92
    %p94 = scmp.eq.s32.totalorder %s17, 0
    %p95 = por %p93, %p94
    %s96 = sadd.s32 %s19, 2
    %s97 = sadd.s32 %s33, 2
    %s98 = ssub.s32 %s18, %s37
    %s99 = ssub.s32 %s96, %s97
    %s100 = sor.u32 %s98, %s99
    %p101 = scmp.eq.s32.totalorder %s100, 0
    %s103 = sadd.s32 %s102, 1
    %s104 = scalar_select %p101, %s102, %s103
    %p107 = pneg %p101
    %p108 = scmp.eq.s32.totalorder %s11, 15
    %p109 = por %p107, %p108
    %p110 = scmp.ne.s32.totalorder %s102, %s105
    %p111 = scmp.eq.s32.totalorder %s11, 0
    %p112 = por %p110, %p111
    %p113 = scmp.ne.s32.totalorder %s102, %s105
    %p114 = scmp.eq.s32.totalorder %s16, 15
    %p115 = por %p113, %p114
    %p116 = scmp.ne.s32.totalorder %s105, %s106
    %p117 = scmp.eq.s32.totalorder %s16, 0
    %p118 = por %p116, %p117
    %p119 = scmp.ne.s32.totalorder %s105, %s106
    %p120 = scmp.eq.s32.totalorder %s17, 15
    %p121 = por %p119, %p120
    %p123 = scmp.ne.s32.totalorder %s106, %s122
    %p124 = scmp.eq.s32.totalorder %s17, 0
    %p125 = por %p123, %p124
    %s127 = sadd.s32 %s126, 1
    %p130 = scmp.eq.s32.totalorder %s11, 15
    %p131 = scmp.ne.s32.totalorder %s126, %s128
    %p132 = scmp.eq.s32.totalorder %s11, 0
    %p133 = por %p131, %p132
    %p134 = scmp.ne.s32.totalorder %s126, %s128
    %p135 = scmp.eq.s32.totalorder %s16, 15
    %p136 = por %p134, %p135
    %p137 = scmp.ne.s32.totalorder %s128, %s129
    %p138 = scmp.eq.s32.totalorder %s16, 0
    %p139 = por %p137, %p138
    %p140 = scmp.ne.s32.totalorder %s128, %s129
    %p141 = scmp.eq.s32.totalorder %s17, 15
    %p142 = por %p140, %p141
    %p144 = scmp.ne.s32.totalorder %s129, %s143
    %p145 = scmp.eq.s32.totalorder %s17, 0
    %p146 = por %p144, %p145
    %s148 = sadd.s32 %s147, 1
    %p151 = scmp.eq.s32.totalorder %s11, 15
    %p152 = scmp.ne.s32.totalorder %s147, %s149
    %p153 = scmp.eq.s32.totalorder %s11, 0
    %p154 = por %p152, %p153
    %p155 = scmp.ne.s32.totalorder %s147, %s149
    %p156 = scmp.eq.s32.totalorder %s16, 15
    %p157 = por %p155, %p156
    %p158 = scmp.ne.s32.totalorder %s149, %s150
    %p159 = scmp.eq.s32.totalorder %s16, 0
    %p160 = por %p158, %p159
    %p161 = scmp.ne.s32.totalorder %s149, %s150
    %p162 = scmp.eq.s32.totalorder %s17, 15
    %p163 = por %p161, %p162
    %p165 = scmp.ne.s32.totalorder %s150, %s164
    %p166 = scmp.eq.s32.totalorder %s17, 0
    %p167 = por %p165, %p166
    %s168 = ssub.s32 %s18, %s37
    %s169 = ssub.s32 %s19, %s33
    %s170 = sor.u32 %s168, %s169
    %s171 = ssub.s32 %s20, %s29
    %s172 = sor.u32 %s170, %s171
    %p173 = scmp.eq.s32.totalorder %s172, 0
    %s175 = sadd.s32 %s174, 1
    %s176 = scalar_select %p173, %s174, %s175
    %p179 = pneg %p173
    %p180 = scmp.eq.s32.totalorder %s11, 15
    %p181 = por %p179, %p180
    %p182 = scmp.ne.s32.totalorder %s174, %s177
    %p183 = scmp.eq.s32.totalorder %s11, 0
    %p184 = por %p182, %p183
    %p185 = scmp.ne.s32.totalorder %s174, %s177
    %p186 = scmp.eq.s32.totalorder %s16, 15
    %p187 = por %p185, %p186
    %p188 = scmp.ne.s32.totalorder %s177, %s178
    %p189 = scmp.eq.s32.totalorder %s16, 0
    %p190 = por %p188, %p189
    %p191 = scmp.ne.s32.totalorder %s177, %s178
    %p192 = scmp.eq.s32.totalorder %s17, 15
    %p193 = por %p191, %p192
    %p195 = scmp.ne.s32.totalorder %s178, %s194
    %p196 = scmp.eq.s32.totalorder %s17, 0
    %p197 = por %p195, %p196
    %p198 = scmp.le.s32.totalorder 1, %s11
    %p199 = scmp.lt.s32.totalorder %s11, 17
    %p200 = pnand %p198, %p199
    %p201 = pneg %p200
    // Predicated region
    $region9: #{conv3d_block_forward.1} parent=5 // pred_check
      _
    $region10: #{conv3d_block_forward.1} parent=5 // pred_check_branch
      %203 = sbr.rel (%p200) target = $region12
    $region11: #{conv3d_block_forward.1} parent=5 // pred_region
      %s204 = ssub.s32 %s11, 1
      // Predicated region
      $region13: #{conv3d_block_forward.1} parent=11 // pred_check
        %p205 = pneg %p139
      $region14: #{conv3d_block_forward.1} parent=11 // pred_check_branch
        %207 = sbr.rel (%p205) target = $region16
      $region15: #{conv3d_block_forward.1} parent=11 // pred_region
        _
      $region16: #{conv3d_block_forward.1} parent=11 // pred_fallthru
        _
      // Predicated region
      $region17: #{conv3d_block_forward.1} parent=11 // pred_check
        %p208 = pneg %p160
      $region18: #{conv3d_block_forward.1} parent=11 // pred_check_branch
        %210 = sbr.rel (%p208) target = $region20
      $region19: #{conv3d_block_forward.1} parent=11 // pred_region
        _
      $region20: #{conv3d_block_forward.1} parent=11 // pred_fallthru
        _
    $region12: #{conv3d_block_forward.1} parent=5 // pred_fallthru
      _
    %p211 = scmp.lt.s32.totalorder %s11, 16
    // Predicated region
    $region21: #{conv3d_block_forward.1} parent=5 // pred_check
      %p212 = pneg %p211
    $region22: #{conv3d_block_forward.1} parent=5 // pred_check_branch
      %214 = sbr.rel (%p212) target = $region24
    $region23: #{conv3d_block_forward.1} parent=5 // pred_region
      // Predicated region
      $region25: #{conv3d_block_forward.1} parent=23 // pred_check
        %p215 = pneg %p52
      $region26: #{conv3d_block_forward.1} parent=23 // pred_check_branch
        %217 = sbr.rel (%p215) target = $region28
      $region27: #{conv3d_block_forward.1} parent=23 // pred_region
        %p218 = scmp.lt.s32.totalorder %s18, 1
        %s219 = scalar_select %p218, %s18, 1
        %p220 = scmp.lt.s32.totalorder %s19, 9
        %s221 = scalar_select %p220, %s19, 9
        %s222 = smul.addr %s221, 14
        %s223 = smul.addr %s219, 140
        %s224 = sadd.s32 %s222, %s223
        %s225 = smul.addr %s224, 4
        %s226 = scalar_lea.vmem %s0, %s225
      $region28: #{conv3d_block_forward.1} parent=23 // pred_fallthru
        _
      // Predicated region
      $region29: #{conv3d_block_forward.1} parent=23 // pred_check
        %p227 = pneg %p82
      $region30: #{conv3d_block_forward.1} parent=23 // pred_check_branch
        %229 = sbr.rel (%p227) target = $region32
      $region31: #{conv3d_block_forward.1} parent=23 // pred_region
        %s230 = sadd.s32 %s19, 1
        %p231 = scmp.lt.s32.totalorder %s18, 1
        %s232 = scalar_select %p231, %s18, 1
        %p233 = scmp.lt.s32.totalorder %s230, 9
        %s234 = scalar_select %p233, %s230, 9
        %s235 = smul.addr %s234, 14
        %s236 = smul.addr %s232, 140
        %s237 = sadd.s32 %s235, %s236
        %s238 = smul.addr %s237, 4
        %s239 = scalar_lea.vmem %s1, %s238
        %s240 = sadd.s32 %s19, 1
      $region32: #{conv3d_block_forward.1} parent=23 // pred_fallthru
        _
      // Predicated region
      $region33: #{conv3d_block_forward.1} parent=23 // pred_check
        %p241 = pneg %p112
      $region34: #{conv3d_block_forward.1} parent=23 // pred_check_branch
        %243 = sbr.rel (%p241) target = $region36
      $region35: #{conv3d_block_forward.1} parent=23 // pred_region
        %s244 = sadd.s32 %s19, 2
        %p245 = scmp.lt.s32.totalorder %s18, 1
        %s246 = scalar_select %p245, %s18, 1
        %p247 = scmp.lt.s32.totalorder %s244, 9
        %s248 = scalar_select %p247, %s244, 9
        %s249 = smul.addr %s248, 14
        %s250 = smul.addr %s246, 140
        %s251 = sadd.s32 %s249, %s250
        %s252 = smul.addr %s251, 4
        %s253 = scalar_lea.vmem %s2, %s252
        %s254 = sadd.s32 %s19, 2
      $region36: #{conv3d_block_forward.1} parent=23 // pred_fallthru
        _
    $region24: #{conv3d_block_forward.1} parent=5 // pred_fallthru
      _
    %p255 = scmp.le.s32.totalorder 1, %s11
    %p256 = scmp.lt.s32.totalorder %s11, 17
    %p257 = pnand %p255, %p256
    %p258 = pneg %p257
    // Predicated region
    $region37: #{conv3d_block_forward.1} parent=5 // pred_check
      _
    $region38: #{conv3d_block_forward.1} parent=5 // pred_check_branch
      %260 = sbr.rel (%p257) target = $region40
    $region39: #{conv3d_block_forward.1} parent=5 // pred_region
      %s261 = ssub.s32 %s11, 1
      %p262 = scmp.lt.s32.totalorder %s21, 1
      %s263 = scalar_select %p262, %s21, 1
      %p264 = scmp.lt.s32.totalorder %s22, 9
      %s265 = scalar_select %p264, %s22, 9
      %s266 = smul.addr %s265, 14
      %s267 = smul.addr %s263, 140
      %s268 = sadd.s32 %s266, %s267
      %s269 = smul.addr %s268, 4
      %s270 = scalar_lea.vmem %s0, %s269
      %p271 = pneg %p58
      %p272 = pneg %p55
      %s273 = sadd.s32 %s22, 1
      %p274 = scmp.lt.s32.totalorder %s21, 1
      %s275 = scalar_select %p274, %s21, 1
      %p276 = scmp.lt.s32.totalorder %s273, 9
      %s277 = scalar_select %p276, %s273, 9
      %s278 = smul.addr %s277, 14
      %s279 = smul.addr %s275, 140
      %s280 = sadd.s32 %s278, %s279
      %s281 = smul.addr %s280, 4
      %s282 = scalar_lea.vmem %s1, %s281
      %p283 = pneg %p88
      %p284 = pneg %p85
      %s285 = sadd.s32 %s22, 2
      %p286 = scmp.lt.s32.totalorder %s21, 1
      %s287 = scalar_select %p286, %s21, 1
      %p288 = scmp.lt.s32.totalorder %s285, 9
      %s289 = scalar_select %p288, %s285, 9
      %s290 = smul.addr %s289, 14
      %s291 = smul.addr %s287, 140
      %s292 = sadd.s32 %s290, %s291
      %s293 = smul.addr %s292, 4
      %s294 = scalar_lea.vmem %s2, %s293
      %p295 = pneg %p118
      %p296 = pneg %p115
      %p297 = pneg %p139
      %p298 = pneg %p136
      %p299 = pneg %p160
      %p300 = pneg %p157
      %p301 = pneg %p190
      %p302 = pneg %p187
      %s303 = smul.u32 10, %s23
      %p304 = scmp.lt.s32.totalorder %s21, 1
      %s305 = scalar_select %p304, %s21, 1
      %p306 = scmp.lt.s32.totalorder %s22, 7
      %s307 = scalar_select %p306, %s22, 7
      %p308 = scmp.lt.s32.totalorder %s303, 9
      %s309 = scalar_select %p308, %s303, 9
      %s310 = smul.addr %s307, 10
      %s311 = sadd.s32 %s309, %s310
      %s312 = smul.addr %s305, 80
      %s313 = sadd.s32 %s311, %s312
      %s314 = smul.addr %s313, 8
      %s315 = scalar_lea.vmem %s5, %s314
      %p316 = scmp.lt.s32.totalorder %s21, 1
      %s317 = scalar_select %p316, %s21, 1
      %p318 = scmp.lt.s32.totalorder %s22, 9
      %s319 = scalar_select %p318, %s22, 9
      %s320 = smul.addr %s319, 14
      %s321 = smul.addr %s317, 140
      %s322 = sadd.s32 %s320, %s321
      %s323 = smul.addr %s322, 4
      %s324 = scalar_lea.vmem %s0, %s323
      %s325 = sadd.s32 %s22, 1
      %p326 = scmp.lt.s32.totalorder %s21, 1
      %s327 = scalar_select %p326, %s21, 1
      %p328 = scmp.lt.s32.totalorder %s325, 9
      %s329 = scalar_select %p328, %s325, 9
      %s330 = smul.addr %s329, 14
      %s331 = smul.addr %s327, 140
      %s332 = sadd.s32 %s330, %s331
      %s333 = smul.addr %s332, 4
      %s334 = scalar_lea.vmem %s1, %s333
      %s335 = sadd.s32 %s22, 1
      %s336 = sadd.s32 %s22, 2
      %p337 = scmp.lt.s32.totalorder %s21, 1
      %s338 = scalar_select %p337, %s21, 1
      %p339 = scmp.lt.s32.totalorder %s336, 9
      %s340 = scalar_select %p339, %s336, 9
      %s341 = smul.addr %s340, 14
      %s342 = smul.addr %s338, 140
      %s343 = sadd.s32 %s341, %s342
      %s344 = smul.addr %s343, 4
      %s345 = scalar_lea.vmem %s2, %s344
      %s346 = sadd.s32 %s22, 2
      %s347 = smul.u32 10, %s23
      %p348 = scmp.lt.s32.totalorder %s21, 1
      %s349 = scalar_select %p348, %s21, 1
      %p350 = scmp.lt.s32.totalorder %s22, 7
      %s351 = scalar_select %p350, %s22, 7
      %p352 = scmp.lt.s32.totalorder %s347, 9
      %s353 = scalar_select %p352, %s347, 9
      %s354 = smul.addr %s351, 10
      %s355 = sadd.s32 %s353, %s354
      %s356 = smul.addr %s349, 80
      %s357 = sadd.s32 %s355, %s356
      %s358 = smul.addr %s357, 8
      %s359 = scalar_lea.vmem %s5, %s358
      %s360 = smul.u32 10, %s23
      %s362 = smul.u32 %s23, 80
      %s363 = sshra.s32 %s362, 3
      %s364 = sand.u32 %s362, 7
      %s365 = smul.addr %s363, 4
      %s366 = scalar_lea.vmem %s324, %s365
      %v367 = vld [vmem:[%s366] sm:$0xf]
      %v368 = vld [vmem:[%s366 + $0x4] sm:$0xf]
      %v369 = vld [vmem:[%s366 + $0x8] sm:$0xf]
      %v370 = vld [vmem:[%s366 + $0xc] sm:$0xf]
      %v371 = vld [vmem:[%s366 + $0x10] sm:$0xf]
      %v372 = vld [vmem:[%s366 + $0x14] sm:$0xf]
      %v373 = vld [vmem:[%s366 + $0x18] sm:$0xf]
      %v374 = vld [vmem:[%s366 + $0x1c] sm:$0xf]
      %v375 = vld [vmem:[%s366 + $0x20] sm:$0xf]
      %v376 = vld [vmem:[%s366 + $0x24] sm:$0xf]
      %v377 = vld [vmem:[%s366 + $0x28] sm:$0xf]
      %v378 = vld [vmem:[%s366 + $0x2c] sm:$0xf]
      %v379 = vld [vmem:[%s366 + $0x30] sm:$0xf]
      %s380 = smul.addr %s363, 4
      %s381 = scalar_lea.vmem %s334, %s380
      %v382 = vld [vmem:[%s381] sm:$0xf]
      %v383 = vld [vmem:[%s381 + $0x4] sm:$0xf]
      %v384 = vld [vmem:[%s381 + $0x8] sm:$0xf]
      %v385 = vld [vmem:[%s381 + $0xc] sm:$0xf]
      %v386 = vld [vmem:[%s381 + $0x10] sm:$0xf]
      %v387 = vld [vmem:[%s381 + $0x14] sm:$0xf]
      %v388 = vld [vmem:[%s381 + $0x18] sm:$0xf]
      %v389 = vld [vmem:[%s381 + $0x1c] sm:$0xf]
      %v390 = vld [vmem:[%s381 + $0x20] sm:$0xf]
      %v391 = vld [vmem:[%s381 + $0x24] sm:$0xf]
      %v392 = vld [vmem:[%s381 + $0x28] sm:$0xf]
      %v393 = vld [vmem:[%s381 + $0x2c] sm:$0xf]
      %v394 = vld [vmem:[%s381 + $0x30] sm:$0xf]
      %s395 = smul.addr %s363, 4
      %s396 = scalar_lea.vmem %s345, %s395
      %v397 = vld [vmem:[%s396] sm:$0xf]
      %v398 = vld [vmem:[%s396 + $0x4] sm:$0xf]
      %v399 = vld [vmem:[%s396 + $0x8] sm:$0xf]
      %v400 = vld [vmem:[%s396 + $0xc] sm:$0xf]
      %v401 = vld [vmem:[%s396 + $0x10] sm:$0xf]
      %v402 = vld [vmem:[%s396 + $0x14] sm:$0xf]
      %v403 = vld [vmem:[%s396 + $0x18] sm:$0xf]
      %v404 = vld [vmem:[%s396 + $0x1c] sm:$0xf]
      %v405 = vld [vmem:[%s396 + $0x20] sm:$0xf]
      %v406 = vld [vmem:[%s396 + $0x24] sm:$0xf]
      %v407 = vld [vmem:[%s396 + $0x28] sm:$0xf]
      %v408 = vld [vmem:[%s396 + $0x2c] sm:$0xf]
      %v409 = vld [vmem:[%s396 + $0x30] sm:$0xf]
      %v420 = vunpack.c.l.b16 %v367
      %v421 = vunpack.c.l.b16 %v368
      %v422 = vunpack.c.l.b16 %v369
      %v423 = vunpack.c.l.b16 %v370
      %v424 = vunpack.c.l.b16 %v371
      %v425 = vunpack.c.l.b16 %v372
      %v426 = vunpack.c.l.b16 %v373
      %v427 = vunpack.c.l.b16 %v374
      %v428 = vunpack.c.l.b16 %v375
      %v429 = vunpack.c.l.b16 %v376
      %v430 = vpack.c.b16 %v421, %v420
      %v431 = vpack.c.b16 %v423, %v422
      %v432 = vpack.c.b16 %v425, %v424
      %v433 = vpack.c.b16 %v427, %v426
      %v434 = vpack.c.b16 %v429, %v428
      %v436 = vunpack.c.l.b16 %v377
      %v437 = vpack.c.b16 %v436, %v436
      %vm438 = vsmask.f32 7424
      %v440 = vshrl.u32 %v430, 16
      %v442 = vshll.u32 %v430, 16
      %v444 = vrot.slane %v442, 1
      %v445 = vor.u32 %v440, %v444
      %v447 = vshll.u32 %v431, 16
      %v449 = vrot.slane %v447, 1
      %v450 = vsel %vm438, %v445, %v449
      %v451 = vshrl.u32 %v431, 16
      %v453 = vor.u32 %v451, %v449
      %v455 = vshll.u32 %v432, 16
      %v457 = vrot.slane %v455, 1
      %v458 = vsel %vm438, %v453, %v457
      %v459 = vshrl.u32 %v432, 16
      %v461 = vor.u32 %v459, %v457
      %v463 = vshll.u32 %v433, 16
      %v465 = vrot.slane %v463, 1
      %v466 = vsel %vm438, %v461, %v465
      %v467 = vshrl.u32 %v433, 16
      %v469 = vor.u32 %v467, %v465
      %v471 = vshll.u32 %v434, 16
      %v473 = vrot.slane %v471, 1
      %v474 = vsel %vm438, %v469, %v473
      %v475 = vshrl.u32 %v434, 16
      %v477 = vor.u32 %v475, %v473
      %v479 = vshll.u32 %v437, 16
      %v481 = vrot.slane %v479, 1
      %v482 = vsel %vm438, %v477, %v481
      %483 = vrot.lane.b32.xlu0 %v450, 4
      %v484 = vpop.permute.xlu0 %483
      %485 = vrot.lane.b32.xlu0 %v458, 4
      %v486 = vpop.permute.xlu0 %485
      %487 = vrot.lane.b32.xlu0 %v466, 4
      %v488 = vpop.permute.xlu0 %487
      %489 = vrot.lane.b32.xlu0 %v474, 4
      %v490 = vpop.permute.xlu0 %489
      %491 = vrot.lane.b32.xlu0 %v482, 4
      %v492 = vpop.permute.xlu0 %491
      %vm493 = vcmask 1046528
      %v494 = vrot.slane %v430, 1
      %v495 = vrot.slane %v431, 1
      %v496 = vsel %vm493, %v494, %v495
      %v497 = vrot.slane %v432, 1
      %v498 = vsel %vm493, %v495, %v497
      %v499 = vrot.slane %v433, 1
      %v500 = vsel %vm493, %v497, %v499
      %v501 = vrot.slane %v434, 1
      %v502 = vsel %vm493, %v499, %v501
      %v503 = vrot.slane %v437, 1
      %v504 = vsel %vm493, %v501, %v503
      %505 = vrot.lane.b32.xlu0 %v496, 8
      %v506 = vpop.permute.xlu0 %505
      %507 = vrot.lane.b32.xlu0 %v498, 8
      %v508 = vpop.permute.xlu0 %507
      %509 = vrot.lane.b32.xlu0 %v500, 8
      %v510 = vpop.permute.xlu0 %509
      %511 = vrot.lane.b32.xlu0 %v502, 8
      %v512 = vpop.permute.xlu0 %511
      %513 = vrot.lane.b32.xlu0 %v504, 8
      %v514 = vpop.permute.xlu0 %513
      %v516 = vunpack.c.l.b16 %v378
      %v517 = vpack.c.b16 %v422, %v421
      %v518 = vpack.c.b16 %v424, %v423
      %v519 = vpack.c.b16 %v426, %v425
      %v520 = vpack.c.b16 %v428, %v427
      %v521 = vpack.c.b16 %v436, %v429
      %v522 = vpack.c.b16 %v516, %v516
      %v523 = vrot.slane %v517, 1
      %v524 = vrot.slane %v518, 1
      %v525 = vsel %vm493, %v523, %v524
      %v526 = vrot.slane %v519, 1
      %v527 = vsel %vm493, %v524, %v526
      %v528 = vrot.slane %v520, 1
      %v529 = vsel %vm493, %v526, %v528
      %v530 = vrot.slane %v521, 1
      %v531 = vsel %vm493, %v528, %v530
      %v532 = vrot.slane %v522, 1
      %v533 = vsel %vm493, %v530, %v532
      %534 = vrot.lane.b32.xlu0 %v525, 12
      %v535 = vpop.permute.xlu0 %534
      %536 = vrot.lane.b32.xlu0 %v527, 12
      %v537 = vpop.permute.xlu0 %536
      %538 = vrot.lane.b32.xlu0 %v529, 12
      %v539 = vpop.permute.xlu0 %538
      %540 = vrot.lane.b32.xlu0 %v531, 12
      %v541 = vpop.permute.xlu0 %540
      %542 = vrot.lane.b32.xlu0 %v533, 12
      %v543 = vpop.permute.xlu0 %542
      %vm544 = vsmask.f32 6400
      %v546 = vshrl.u32 %v517, 16
      %v548 = vrot.slane %v546, 1
      %v549 = vshll.u32 %v517, 16
      %v551 = vrot.slane %v549, 2
      %v552 = vor.u32 %v548, %v551
      %v554 = vshrl.u32 %v518, 16
      %v556 = vrot.slane %v554, 1
      %v557 = vshll.u32 %v518, 16
      %v559 = vrot.slane %v557, 2
      %v560 = vor.u32 %v556, %v559
      %v561 = vsel %vm544, %v552, %v560
      %v563 = vshrl.u32 %v519, 16
      %v565 = vrot.slane %v563, 1
      %v566 = vshll.u32 %v519, 16
      %v568 = vrot.slane %v566, 2
      %v569 = vor.u32 %v565, %v568
      %v570 = vsel %vm544, %v560, %v569
      %v572 = vshrl.u32 %v520, 16
      %v574 = vrot.slane %v572, 1
      %v575 = vshll.u32 %v520, 16
      %v577 = vrot.slane %v575, 2
      %v578 = vor.u32 %v574, %v577
      %v579 = vsel %vm544, %v569, %v578
      %v581 = vshrl.u32 %v521, 16
      %v583 = vrot.slane %v581, 1
      %v584 = vshll.u32 %v521, 16
      %v586 = vrot.slane %v584, 2
      %v587 = vor.u32 %v583, %v586
      %v588 = vsel %vm544, %v578, %v587
      %v590 = vshrl.u32 %v522, 16
      %v592 = vrot.slane %v590, 1
      %v593 = vshll.u32 %v522, 16
      %v595 = vrot.slane %v593, 2
      %v596 = vor.u32 %v592, %v595
      %v597 = vsel %vm544, %v587, %v596
      %598 = vrot.lane.b32.xlu0 %v561, 16
      %v599 = vpop.permute.xlu0 %598
      %600 = vrot.lane.b32.xlu0 %v570, 16
      %v601 = vpop.permute.xlu0 %600
      %602 = vrot.lane.b32.xlu0 %v579, 16
      %v603 = vpop.permute.xlu0 %602
      %604 = vrot.lane.b32.xlu0 %v588, 16
      %v605 = vpop.permute.xlu0 %604
      %606 = vrot.lane.b32.xlu0 %v597, 16
      %v607 = vpop.permute.xlu0 %606
      %vm608 = vcmask 1045504
      %v609 = vrot.slane %v517, 2
      %v610 = vrot.slane %v518, 2
      %v611 = vsel %vm608, %v609, %v610
      %v612 = vrot.slane %v519, 2
      %v613 = vsel %vm608, %v610, %v612
      %v614 = vrot.slane %v520, 2
      %v615 = vsel %vm608, %v612, %v614
      %v616 = vrot.slane %v521, 2
      %v617 = vsel %vm608, %v614, %v616
      %v618 = vrot.slane %v522, 2
      %v619 = vsel %vm608, %v616, %v618
      %620 = vrot.lane.b32.xlu0 %v611, 20
      %v621 = vpop.permute.xlu0 %620
      %622 = vrot.lane.b32.xlu0 %v613, 20
      %v623 = vpop.permute.xlu0 %622
      %624 = vrot.lane.b32.xlu0 %v615, 20
      %v625 = vpop.permute.xlu0 %624
      %626 = vrot.lane.b32.xlu0 %v617, 20
      %v627 = vpop.permute.xlu0 %626
      %628 = vrot.lane.b32.xlu0 %v619, 20
      %v629 = vpop.permute.xlu0 %628
      %v631 = vunpack.c.l.b16 %v379
      %v632 = vpack.c.b16 %v516, %v436
      %v633 = vpack.c.b16 %v631, %v631
      %v634 = vrot.slane %v431, 2
      %v635 = vrot.slane %v432, 2
      %v636 = vsel %vm608, %v634, %v635
      %v637 = vrot.slane %v433, 2
      %v638 = vsel %vm608, %v635, %v637
      %v639 = vrot.slane %v434, 2
      %v640 = vsel %vm608, %v637, %v639
      %v641 = vrot.slane %v632, 2
      %v642 = vsel %vm608, %v639, %v641
      %v643 = vrot.slane %v633, 2
      %v644 = vsel %vm608, %v641, %v643
      %645 = vrot.lane.b32.xlu0 %v636, 24
      %v646 = vpop.permute.xlu0 %645
      %647 = vrot.lane.b32.xlu0 %v638, 24
      %v648 = vpop.permute.xlu0 %647
      %649 = vrot.lane.b32.xlu0 %v640, 24
      %v650 = vpop.permute.xlu0 %649
      %651 = vrot.lane.b32.xlu0 %v642, 24
      %v652 = vpop.permute.xlu0 %651
      %653 = vrot.lane.b32.xlu0 %v644, 24
      %v654 = vpop.permute.xlu0 %653
      %vm655 = vsmask.f32 5376
      %v656 = vrot.slane %v451, 2
      %v657 = vrot.slane %v447, 3
      %v658 = vor.u32 %v656, %v657
      %v659 = vrot.slane %v459, 2
      %v660 = vrot.slane %v455, 3
      %v661 = vor.u32 %v659, %v660
      %v662 = vsel %vm655, %v658, %v661
      %v663 = vrot.slane %v467, 2
      %v664 = vrot.slane %v463, 3
      %v665 = vor.u32 %v663, %v664
      %v666 = vsel %vm655, %v661, %v665
      %v667 = vrot.slane %v475, 2
      %v668 = vrot.slane %v471, 3
      %v669 = vor.u32 %v667, %v668
      %v670 = vsel %vm655, %v665, %v669
      %v672 = vshrl.u32 %v632, 16
      %v674 = vrot.slane %v672, 2
      %v675 = vshll.u32 %v632, 16
      %v677 = vrot.slane %v675, 3
      %v678 = vor.u32 %v674, %v677
      %v679 = vsel %vm655, %v669, %v678
      %v681 = vshrl.u32 %v633, 16
      %v683 = vrot.slane %v681, 2
      %v684 = vshll.u32 %v633, 16
      %v686 = vrot.slane %v684, 3
      %v687 = vor.u32 %v683, %v686
      %v688 = vsel %vm655, %v678, %v687
      %689 = vrot.lane.b32.xlu0 %v662, 28
      %v690 = vpop.permute.xlu0 %689
      %691 = vrot.lane.b32.xlu0 %v666, 28
      %v692 = vpop.permute.xlu0 %691
      %693 = vrot.lane.b32.xlu0 %v670, 28
      %v694 = vpop.permute.xlu0 %693
      %695 = vrot.lane.b32.xlu0 %v679, 28
      %v696 = vpop.permute.xlu0 %695
      %697 = vrot.lane.b32.xlu0 %v688, 28
      %v698 = vpop.permute.xlu0 %697
      %vm699 = vcmask 1044480
      %v700 = vrot.slane %v431, 3
      %v701 = vrot.slane %v432, 3
      %v702 = vsel %vm699, %v700, %v701
      %v703 = vrot.slane %v433, 3
      %v704 = vsel %vm699, %v701, %v703
      %v705 = vrot.slane %v434, 3
      %v706 = vsel %vm699, %v703, %v705
      %v707 = vrot.slane %v632, 3
      %v708 = vsel %vm699, %v705, %v707
      %v709 = vrot.slane %v633, 3
      %v710 = vsel %vm699, %v707, %v709
      %711 = vrot.lane.b32.xlu0 %v702, 32
      %v712 = vpop.permute.xlu0 %711
      %713 = vrot.lane.b32.xlu0 %v704, 32
      %v714 = vpop.permute.xlu0 %713
      %715 = vrot.lane.b32.xlu0 %v706, 32
      %v716 = vpop.permute.xlu0 %715
      %717 = vrot.lane.b32.xlu0 %v708, 32
      %v718 = vpop.permute.xlu0 %717
      %719 = vrot.lane.b32.xlu0 %v710, 32
      %v720 = vpop.permute.xlu0 %719
      %v731 = vunpack.c.l.b16 %v382
      %v732 = vunpack.c.l.b16 %v383
      %v733 = vunpack.c.l.b16 %v384
      %v734 = vunpack.c.l.b16 %v385
      %v735 = vunpack.c.l.b16 %v386
      %v736 = vunpack.c.l.b16 %v387
      %v737 = vunpack.c.l.b16 %v388
      %v738 = vunpack.c.l.b16 %v389
      %v739 = vunpack.c.l.b16 %v390
      %v740 = vunpack.c.l.b16 %v391
      %v741 = vpack.c.b16 %v732, %v731
      %v742 = vpack.c.b16 %v734, %v733
      %v743 = vpack.c.b16 %v736, %v735
      %v744 = vpack.c.b16 %v738, %v737
      %v745 = vpack.c.b16 %v740, %v739
      %746 = vrot.lane.b32.xlu0 %v741, 36
      %v747 = vpop.permute.xlu0 %746
      %748 = vrot.lane.b32.xlu0 %v742, 36
      %v749 = vpop.permute.xlu0 %748
      %750 = vrot.lane.b32.xlu0 %v743, 36
      %v751 = vpop.permute.xlu0 %750
      %752 = vrot.lane.b32.xlu0 %v744, 36
      %v753 = vpop.permute.xlu0 %752
      %754 = vrot.lane.b32.xlu0 %v745, 36
      %v755 = vpop.permute.xlu0 %754
      %v757 = vunpack.c.l.b16 %v392
      %v758 = vpack.c.b16 %v757, %v757
      %v760 = vshrl.u32 %v741, 16
      %v762 = vshll.u32 %v741, 16
      %v764 = vrot.slane %v762, 1
      %v765 = vor.u32 %v760, %v764
      %v767 = vshll.u32 %v742, 16
      %v769 = vrot.slane %v767, 1
      %v770 = vsel %vm438, %v765, %v769
      %v771 = vshrl.u32 %v742, 16
      %v773 = vor.u32 %v771, %v769
      %v775 = vshll.u32 %v743, 16
      %v777 = vrot.slane %v775, 1
      %v778 = vsel %vm438, %v773, %v777
      %v779 = vshrl.u32 %v743, 16
      %v781 = vor.u32 %v779, %v777
      %v783 = vshll.u32 %v744, 16
      %v785 = vrot.slane %v783, 1
      %v786 = vsel %vm438, %v781, %v785
      %v787 = vshrl.u32 %v744, 16
      %v789 = vor.u32 %v787, %v785
      %v791 = vshll.u32 %v745, 16
      %v793 = vrot.slane %v791, 1
      %v794 = vsel %vm438, %v789, %v793
      %v795 = vshrl.u32 %v745, 16
      %v797 = vor.u32 %v795, %v793
      %v799 = vshll.u32 %v758, 16
      %v801 = vrot.slane %v799, 1
      %v802 = vsel %vm438, %v797, %v801
      %803 = vrot.lane.b32.xlu0 %v770, 40
      %v804 = vpop.permute.xlu0 %803
      %805 = vrot.lane.b32.xlu0 %v778, 40
      %v806 = vpop.permute.xlu0 %805
      %807 = vrot.lane.b32.xlu0 %v786, 40
      %v808 = vpop.permute.xlu0 %807
      %809 = vrot.lane.b32.xlu0 %v794, 40
      %v810 = vpop.permute.xlu0 %809
      %811 = vrot.lane.b32.xlu0 %v802, 40
      %v812 = vpop.permute.xlu0 %811
      %v813 = vrot.slane %v741, 1
      %v814 = vrot.slane %v742, 1
      %v815 = vsel %vm493, %v813, %v814
      %v816 = vrot.slane %v743, 1
      %v817 = vsel %vm493, %v814, %v816
      %v818 = vrot.slane %v744, 1
      %v819 = vsel %vm493, %v816, %v818
      %v820 = vrot.slane %v745, 1
      %v821 = vsel %vm493, %v818, %v820
      %v822 = vrot.slane %v758, 1
      %v823 = vsel %vm493, %v820, %v822
      %824 = vrot.lane.b32.xlu0 %v815, 44
      %v825 = vpop.permute.xlu0 %824
      %826 = vrot.lane.b32.xlu0 %v817, 44
      %v827 = vpop.permute.xlu0 %826
      %828 = vrot.lane.b32.xlu0 %v819, 44
      %v829 = vpop.permute.xlu0 %828
      %830 = vrot.lane.b32.xlu0 %v821, 44
      %v831 = vpop.permute.xlu0 %830
      %832 = vrot.lane.b32.xlu0 %v823, 44
      %v833 = vpop.permute.xlu0 %832
      %v835 = vunpack.c.l.b16 %v393
      %v836 = vpack.c.b16 %v733, %v732
      %v837 = vpack.c.b16 %v735, %v734
      %v838 = vpack.c.b16 %v737, %v736
      %v839 = vpack.c.b16 %v739, %v738
      %v840 = vpack.c.b16 %v757, %v740
      %v841 = vpack.c.b16 %v835, %v835
      %v842 = vrot.slane %v836, 1
      %v843 = vrot.slane %v837, 1
      %v844 = vsel %vm493, %v842, %v843
      %v845 = vrot.slane %v838, 1
      %v846 = vsel %vm493, %v843, %v845
      %v847 = vrot.slane %v839, 1
      %v848 = vsel %vm493, %v845, %v847
      %v849 = vrot.slane %v840, 1
      %v850 = vsel %vm493, %v847, %v849
      %v851 = vrot.slane %v841, 1
      %v852 = vsel %vm493, %v849, %v851
      %853 = vrot.lane.b32.xlu0 %v844, 48
      %v854 = vpop.permute.xlu0 %853
      %855 = vrot.lane.b32.xlu0 %v846, 48
      %v856 = vpop.permute.xlu0 %855
      %857 = vrot.lane.b32.xlu0 %v848, 48
      %v858 = vpop.permute.xlu0 %857
      %859 = vrot.lane.b32.xlu0 %v850, 48
      %v860 = vpop.permute.xlu0 %859
      %861 = vrot.lane.b32.xlu0 %v852, 48
      %v862 = vpop.permute.xlu0 %861
      %v864 = vshrl.u32 %v836, 16
      %v866 = vrot.slane %v864, 1
      %v867 = vshll.u32 %v836, 16
      %v869 = vrot.slane %v867, 2
      %v870 = vor.u32 %v866, %v869
      %v872 = vshrl.u32 %v837, 16
      %v874 = vrot.slane %v872, 1
      %v875 = vshll.u32 %v837, 16
      %v877 = vrot.slane %v875, 2
      %v878 = vor.u32 %v874, %v877
      %v879 = vsel %vm544, %v870, %v878
      %v881 = vshrl.u32 %v838, 16
      %v883 = vrot.slane %v881, 1
      %v884 = vshll.u32 %v838, 16
      %v886 = vrot.slane %v884, 2
      %v887 = vor.u32 %v883, %v886
      %v888 = vsel %vm544, %v878, %v887
      %v890 = vshrl.u32 %v839, 16
      %v892 = vrot.slane %v890, 1
      %v893 = vshll.u32 %v839, 16
      %v895 = vrot.slane %v893, 2
      %v896 = vor.u32 %v892, %v895
      %v897 = vsel %vm544, %v887, %v896
      %v899 = vshrl.u32 %v840, 16
      %v901 = vrot.slane %v899, 1
      %v902 = vshll.u32 %v840, 16
      %v904 = vrot.slane %v902, 2
      %v905 = vor.u32 %v901, %v904
      %v906 = vsel %vm544, %v896, %v905
      %v908 = vshrl.u32 %v841, 16
      %v910 = vrot.slane %v908, 1
      %v911 = vshll.u32 %v841, 16
      %v913 = vrot.slane %v911, 2
      %v914 = vor.u32 %v910, %v913
      %v915 = vsel %vm544, %v905, %v914
      %916 = vrot.lane.b32.xlu0 %v879, 52
      %v917 = vpop.permute.xlu0 %916
      %918 = vrot.lane.b32.xlu0 %v888, 52
      %v919 = vpop.permute.xlu0 %918
      %920 = vrot.lane.b32.xlu0 %v897, 52
      %v921 = vpop.permute.xlu0 %920
      %922 = vrot.lane.b32.xlu0 %v906, 52
      %v923 = vpop.permute.xlu0 %922
      %924 = vrot.lane.b32.xlu0 %v915, 52
      %v925 = vpop.permute.xlu0 %924
      %v926 = vrot.slane %v836, 2
      %v927 = vrot.slane %v837, 2
      %v928 = vsel %vm608, %v926, %v927
      %v929 = vrot.slane %v838, 2
      %v930 = vsel %vm608, %v927, %v929
      %v931 = vrot.slane %v839, 2
      %v932 = vsel %vm608, %v929, %v931
      %v933 = vrot.slane %v840, 2
      %v934 = vsel %vm608, %v931, %v933
      %v935 = vrot.slane %v841, 2
      %v936 = vsel %vm608, %v933, %v935
      %937 = vrot.lane.b32.xlu0 %v928, 56
      %v938 = vpop.permute.xlu0 %937
      %939 = vrot.lane.b32.xlu0 %v930, 56
      %v940 = vpop.permute.xlu0 %939
      %941 = vrot.lane.b32.xlu0 %v932, 56
      %v942 = vpop.permute.xlu0 %941
      %943 = vrot.lane.b32.xlu0 %v934, 56
      %v944 = vpop.permute.xlu0 %943
      %945 = vrot.lane.b32.xlu0 %v936, 56
      %v946 = vpop.permute.xlu0 %945
      %v948 = vunpack.c.l.b16 %v394
      %v949 = vpack.c.b16 %v835, %v757
      %v950 = vpack.c.b16 %v948, %v948
      %v951 = vrot.slane %v742, 2
      %v952 = vrot.slane %v743, 2
      %v953 = vsel %vm608, %v951, %v952
      %v954 = vrot.slane %v744, 2
      %v955 = vsel %vm608, %v952, %v954
      %v956 = vrot.slane %v745, 2
      %v957 = vsel %vm608, %v954, %v956
      %v958 = vrot.slane %v949, 2
      %v959 = vsel %vm608, %v956, %v958
      %v960 = vrot.slane %v950, 2
      %v961 = vsel %vm608, %v958, %v960
      %962 = vrot.lane.b32.xlu0 %v953, 60
      %v963 = vpop.permute.xlu0 %962
      %964 = vrot.lane.b32.xlu0 %v955, 60
      %v965 = vpop.permute.xlu0 %964
      %966 = vrot.lane.b32.xlu0 %v957, 60
      %v967 = vpop.permute.xlu0 %966
      %968 = vrot.lane.b32.xlu0 %v959, 60
      %v969 = vpop.permute.xlu0 %968
      %970 = vrot.lane.b32.xlu0 %v961, 60
      %v971 = vpop.permute.xlu0 %970
      %vm972 = vcmask 31744
      %v974 = vsel %vm972, %v430, %v484
      %v976 = vsel %vm972, %v431, %v486
      %v978 = vsel %vm972, %v432, %v488
      %v980 = vsel %vm972, %v433, %v490
      %v982 = vsel %vm972, %v434, %v492
      %vm983 = vcmask 64512
      %v985 = vsel %vm983, %v974, %v506
      %v987 = vsel %vm983, %v976, %v508
      %v989 = vsel %vm983, %v978, %v510
      %v991 = vsel %vm983, %v980, %v512
      %v993 = vsel %vm983, %v982, %v514
      %vm994 = vcmask 97280
      %v996 = vsel %vm994, %v985, %v535
      %v998 = vsel %vm994, %v987, %v537
      %v1000 = vsel %vm994, %v989, %v539
      %v1002 = vsel %vm994, %v991, %v541
      %v1004 = vsel %vm994, %v993, %v543
      %vm1005 = vcmask 130048
      %v1007 = vsel %vm1005, %v996, %v599
      %v1009 = vsel %vm1005, %v998, %v601
      %v1011 = vsel %vm1005, %v1000, %v603
      %v1013 = vsel %vm1005, %v1002, %v605
      %v1015 = vsel %vm1005, %v1004, %v607
      %vm1016 = vcmask 162816
      %v1018 = vsel %vm1016, %v1007, %v621
      %v1020 = vsel %vm1016, %v1009, %v623
      %v1022 = vsel %vm1016, %v1011, %v625
      %v1024 = vsel %vm1016, %v1013, %v627
      %v1026 = vsel %vm1016, %v1015, %v629
      %vm1027 = vcmask 195584
      %v1029 = vsel %vm1027, %v1018, %v646
      %v1031 = vsel %vm1027, %v1020, %v648
      %v1033 = vsel %vm1027, %v1022, %v650
      %v1035 = vsel %vm1027, %v1024, %v652
      %v1037 = vsel %vm1027, %v1026, %v654
      %vm1038 = vcmask 228352
      %v1040 = vsel %vm1038, %v1029, %v690
      %v1042 = vsel %vm1038, %v1031, %v692
      %v1044 = vsel %vm1038, %v1033, %v694
      %v1046 = vsel %vm1038, %v1035, %v696
      %v1048 = vsel %vm1038, %v1037, %v698
      %vm1049 = vcmask 261120
      %v1051 = vsel %vm1049, %v1040, %v712
      %v1053 = vsel %vm1049, %v1042, %v714
      %v1055 = vsel %vm1049, %v1044, %v716
      %v1057 = vsel %vm1049, %v1046, %v718
      %v1059 = vsel %vm1049, %v1048, %v720
      %vm1060 = vcmask 293888
      %v1062 = vsel %vm1060, %v1051, %v747
      %v1064 = vsel %vm1060, %v1053, %v749
      %v1066 = vsel %vm1060, %v1055, %v751
      %v1068 = vsel %vm1060, %v1057, %v753
      %v1070 = vsel %vm1060, %v1059, %v755
      %vm1071 = vcmask 326656
      %v1073 = vsel %vm1071, %v1062, %v804
      %v1075 = vsel %vm1071, %v1064, %v806
      %v1077 = vsel %vm1071, %v1066, %v808
      %v1079 = vsel %vm1071, %v1068, %v810
      %v1081 = vsel %vm1071, %v1070, %v812
      %vm1082 = vcmask 359424
      %v1084 = vsel %vm1082, %v1073, %v825
      %v1086 = vsel %vm1082, %v1075, %v827
      %v1088 = vsel %vm1082, %v1077, %v829
      %v1090 = vsel %vm1082, %v1079, %v831
      %v1092 = vsel %vm1082, %v1081, %v833
      %vm1093 = vcmask 392192
      %v1095 = vsel %vm1093, %v1084, %v854
      %v1097 = vsel %vm1093, %v1086, %v856
      %v1099 = vsel %vm1093, %v1088, %v858
      %v1101 = vsel %vm1093, %v1090, %v860
      %v1103 = vsel %vm1093, %v1092, %v862
      %vm1104 = vcmask 424960
      %v1106 = vsel %vm1104, %v1095, %v917
      %v1108 = vsel %vm1104, %v1097, %v919
      %v1110 = vsel %vm1104, %v1099, %v921
      %v1112 = vsel %vm1104, %v1101, %v923
      %v1114 = vsel %vm1104, %v1103, %v925
      %vm1115 = vcmask 457728
      %v1117 = vsel %vm1115, %v1106, %v938
      %v1119 = vsel %vm1115, %v1108, %v940
      %v1121 = vsel %vm1115, %v1110, %v942
      %v1123 = vsel %vm1115, %v1112, %v944
      %v1125 = vsel %vm1115, %v1114, %v946
      %vm1126 = vcmask 490496
      %v1128 = vsel %vm1126, %v1117, %v963
      %v1130 = vsel %vm1126, %v1119, %v965
      %v1132 = vsel %vm1126, %v1121, %v967
      %v1134 = vsel %vm1126, %v1123, %v969
      %v1136 = vsel %vm1126, %v1125, %v971
      %v1138 = vshll.u32 %v949, 16
      %v1140 = vrot.slane %v1138, 1
      %v1141 = vsel %vm438, %v797, %v1140
      %v1142 = vshrl.u32 %v949, 16
      %v1144 = vor.u32 %v1142, %v1140
      %v1146 = vshll.u32 %v950, 16
      %v1148 = vrot.slane %v1146, 1
      %v1149 = vsel %vm438, %v1144, %v1148
      %v1150 = vshrl.u32 %v950, 16
      %v1152 = vor.u32 %v1150, %v1148
      %1153 = vrot.lane.b32.xlu0 %v778, 4
      %v1154 = vpop.permute.xlu0 %1153
      %1155 = vrot.lane.b32.xlu0 %v786, 4
      %v1156 = vpop.permute.xlu0 %1155
      %1157 = vrot.lane.b32.xlu0 %v794, 4
      %v1158 = vpop.permute.xlu0 %1157
      %1159 = vrot.lane.b32.xlu0 %v1141, 4
      %v1160 = vpop.permute.xlu0 %1159
      %1161 = vrot.lane.b32.xlu0 %v1149, 4
      %v1162 = vpop.permute.xlu0 %1161
      %1163 = vrot.lane.b32.xlu0 %v1152, 4
      %v1164 = vpop.permute.xlu0 %1163
      %v1175 = vunpack.c.l.b16 %v397
      %v1176 = vunpack.c.l.b16 %v398
      %v1177 = vunpack.c.l.b16 %v399
      %v1178 = vunpack.c.l.b16 %v400
      %v1179 = vunpack.c.l.b16 %v401
      %v1180 = vunpack.c.l.b16 %v402
      %v1181 = vunpack.c.l.b16 %v403
      %v1182 = vunpack.c.l.b16 %v404
      %v1183 = vunpack.c.l.b16 %v405
      %v1184 = vunpack.c.l.b16 %v406
      %v1185 = vpack.c.b16 %v1176, %v1175
      %v1186 = vpack.c.b16 %v1178, %v1177
      %v1187 = vpack.c.b16 %v1180, %v1179
      %v1188 = vpack.c.b16 %v1182, %v1181
      %v1189 = vpack.c.b16 %v1184, %v1183
      %vm1190 = vsmask.f32 2304
      %v1192 = vshrl.u32 %v1185, 16
      %v1194 = vrot.slane %v1192, 5
      %v1195 = vshll.u32 %v1185, 16
      %v1197 = vrot.slane %v1195, 6
      %v1198 = vor.u32 %v1194, %v1197
      %v1200 = vshrl.u32 %v1186, 16
      %v1202 = vrot.slane %v1200, 5
      %v1203 = vshll.u32 %v1186, 16
      %v1205 = vrot.slane %v1203, 6
      %v1206 = vor.u32 %v1202, %v1205
      %v1207 = vsel %vm1190, %v1198, %v1206
      %v1209 = vshrl.u32 %v1187, 16
      %v1211 = vrot.slane %v1209, 5
      %v1212 = vshll.u32 %v1187, 16
      %v1214 = vrot.slane %v1212, 6
      %v1215 = vor.u32 %v1211, %v1214
      %v1216 = vsel %vm1190, %v1206, %v1215
      %v1218 = vshrl.u32 %v1188, 16
      %v1220 = vrot.slane %v1218, 5
      %v1221 = vshll.u32 %v1188, 16
      %v1223 = vrot.slane %v1221, 6
      %v1224 = vor.u32 %v1220, %v1223
      %v1225 = vsel %vm1190, %v1215, %v1224
      %v1227 = vshrl.u32 %v1189, 16
      %v1229 = vrot.slane %v1227, 5
      %v1230 = vshll.u32 %v1189, 16
      %v1232 = vrot.slane %v1230, 6
      %v1233 = vor.u32 %v1229, %v1232
      %v1234 = vsel %vm1190, %v1224, %v1233
      %1235 = vrot.lane.b32.xlu0 %v1198, 8
      %v1236 = vpop.permute.xlu0 %1235
      %1237 = vrot.lane.b32.xlu0 %v1207, 8
      %v1238 = vpop.permute.xlu0 %1237
      %1239 = vrot.lane.b32.xlu0 %v1216, 8
      %v1240 = vpop.permute.xlu0 %1239
      %1241 = vrot.lane.b32.xlu0 %v1225, 8
      %v1242 = vpop.permute.xlu0 %1241
      %1243 = vrot.lane.b32.xlu0 %v1234, 8
      %v1244 = vpop.permute.xlu0 %1243
      %1245 = vrot.lane.b32.xlu0 %v1233, 8
      %v1246 = vpop.permute.xlu0 %1245
      %v1248 = vunpack.c.l.b16 %v407
      %v1249 = vpack.c.b16 %v1248, %v1248
      %vm1250 = vcmask 1041408
      %v1251 = vrot.slane %v1185, 6
      %v1252 = vrot.slane %v1186, 6
      %v1253 = vsel %vm1250, %v1251, %v1252
      %v1254 = vrot.slane %v1187, 6
      %v1255 = vsel %vm1250, %v1252, %v1254
      %v1256 = vrot.slane %v1188, 6
      %v1257 = vsel %vm1250, %v1254, %v1256
      %v1258 = vrot.slane %v1189, 6
      %v1259 = vsel %vm1250, %v1256, %v1258
      %v1260 = vrot.slane %v1249, 6
      %v1261 = vsel %vm1250, %v1258, %v1260
      %1262 = vrot.lane.b32.xlu0 %v1251, 12
      %v1263 = vpop.permute.xlu0 %1262
      %1264 = vrot.lane.b32.xlu0 %v1253, 12
      %v1265 = vpop.permute.xlu0 %1264
      %1266 = vrot.lane.b32.xlu0 %v1255, 12
      %v1267 = vpop.permute.xlu0 %1266
      %1268 = vrot.lane.b32.xlu0 %v1257, 12
      %v1269 = vpop.permute.xlu0 %1268
      %1270 = vrot.lane.b32.xlu0 %v1259, 12
      %v1271 = vpop.permute.xlu0 %1270
      %1272 = vrot.lane.b32.xlu0 %v1261, 12
      %v1273 = vpop.permute.xlu0 %1272
      %vm1274 = vsmask.f32 1280
      %v1275 = vrot.slane %v1192, 6
      %v1276 = vrot.slane %v1195, 7
      %v1277 = vor.u32 %v1275, %v1276
      %v1278 = vrot.slane %v1200, 6
      %v1279 = vrot.slane %v1203, 7
      %v1280 = vor.u32 %v1278, %v1279
      %v1281 = vsel %vm1274, %v1277, %v1280
      %v1282 = vrot.slane %v1209, 6
      %v1283 = vrot.slane %v1212, 7
      %v1284 = vor.u32 %v1282, %v1283
      %v1285 = vsel %vm1274, %v1280, %v1284
      %v1286 = vrot.slane %v1218, 6
      %v1287 = vrot.slane %v1221, 7
      %v1288 = vor.u32 %v1286, %v1287
      %v1289 = vsel %vm1274, %v1284, %v1288
      %v1290 = vrot.slane %v1227, 6
      %v1291 = vrot.slane %v1230, 7
      %v1292 = vor.u32 %v1290, %v1291
      %v1293 = vsel %vm1274, %v1288, %v1292
      %v1295 = vshrl.u32 %v1249, 16
      %v1297 = vrot.slane %v1295, 6
      %v1298 = vshll.u32 %v1249, 16
      %v1300 = vrot.slane %v1298, 7
      %v1301 = vor.u32 %v1297, %v1300
      %v1302 = vsel %vm1274, %v1292, %v1301
      %1303 = vrot.lane.b32.xlu0 %v1277, 16
      %v1304 = vpop.permute.xlu0 %1303
      %1305 = vrot.lane.b32.xlu0 %v1281, 16
      %v1306 = vpop.permute.xlu0 %1305
      %1307 = vrot.lane.b32.xlu0 %v1285, 16
      %v1308 = vpop.permute.xlu0 %1307
      %1309 = vrot.lane.b32.xlu0 %v1289, 16
      %v1310 = vpop.permute.xlu0 %1309
      %1311 = vrot.lane.b32.xlu0 %v1293, 16
      %v1312 = vpop.permute.xlu0 %1311
      %1313 = vrot.lane.b32.xlu0 %v1302, 16
      %v1314 = vpop.permute.xlu0 %1313
      %v1316 = vunpack.c.l.b16 %v408
      %v1317 = vpack.c.b16 %v1177, %v1176
      %v1318 = vpack.c.b16 %v1179, %v1178
      %v1319 = vpack.c.b16 %v1181, %v1180
      %v1320 = vpack.c.b16 %v1183, %v1182
      %v1321 = vpack.c.b16 %v1248, %v1184
      %v1322 = vpack.c.b16 %v1316, %v1316
      %v1324 = vshrl.u32 %v1317, 16
      %v1326 = vrot.slane %v1324, 6
      %v1327 = vshll.u32 %v1317, 16
      %v1329 = vrot.slane %v1327, 7
      %v1330 = vor.u32 %v1326, %v1329
      %v1332 = vshrl.u32 %v1318, 16
      %v1334 = vrot.slane %v1332, 6
      %v1335 = vshll.u32 %v1318, 16
      %v1337 = vrot.slane %v1335, 7
      %v1338 = vor.u32 %v1334, %v1337
      %v1339 = vsel %vm1274, %v1330, %v1338
      %v1341 = vshrl.u32 %v1319, 16
      %v1343 = vrot.slane %v1341, 6
      %v1344 = vshll.u32 %v1319, 16
      %v1346 = vrot.slane %v1344, 7
      %v1347 = vor.u32 %v1343, %v1346
      %v1348 = vsel %vm1274, %v1338, %v1347
      %v1350 = vshrl.u32 %v1320, 16
      %v1352 = vrot.slane %v1350, 6
      %v1353 = vshll.u32 %v1320, 16
      %v1355 = vrot.slane %v1353, 7
      %v1356 = vor.u32 %v1352, %v1355
      %v1357 = vsel %vm1274, %v1347, %v1356
      %v1359 = vshrl.u32 %v1321, 16
      %v1361 = vrot.slane %v1359, 6
      %v1362 = vshll.u32 %v1321, 16
      %v1364 = vrot.slane %v1362, 7
      %v1365 = vor.u32 %v1361, %v1364
      %v1366 = vsel %vm1274, %v1356, %v1365
      %v1368 = vshrl.u32 %v1322, 16
      %v1370 = vrot.slane %v1368, 6
      %v1371 = vshll.u32 %v1322, 16
      %v1373 = vrot.slane %v1371, 7
      %v1374 = vor.u32 %v1370, %v1373
      %v1375 = vsel %vm1274, %v1365, %v1374
      %1376 = vrot.lane.b32.xlu0 %v1330, 20
      %v1377 = vpop.permute.xlu0 %1376
      %1378 = vrot.lane.b32.xlu0 %v1339, 20
      %v1379 = vpop.permute.xlu0 %1378
      %1380 = vrot.lane.b32.xlu0 %v1348, 20
      %v1381 = vpop.permute.xlu0 %1380
      %1382 = vrot.lane.b32.xlu0 %v1357, 20
      %v1383 = vpop.permute.xlu0 %1382
      %1384 = vrot.lane.b32.xlu0 %v1366, 20
      %v1385 = vpop.permute.xlu0 %1384
      %1386 = vrot.lane.b32.xlu0 %v1375, 20
      %v1387 = vpop.permute.xlu0 %1386
      %vm1388 = vcmask 1040384
      %v1389 = vrot.slane %v1317, 7
      %v1390 = vrot.slane %v1318, 7
      %v1391 = vsel %vm1388, %v1389, %v1390
      %v1392 = vrot.slane %v1319, 7
      %v1393 = vsel %vm1388, %v1390, %v1392
      %v1394 = vrot.slane %v1320, 7
      %v1395 = vsel %vm1388, %v1392, %v1394
      %v1396 = vrot.slane %v1321, 7
      %v1397 = vsel %vm1388, %v1394, %v1396
      %v1398 = vrot.slane %v1322, 7
      %v1399 = vsel %vm1388, %v1396, %v1398
      %1400 = vrot.lane.b32.xlu0 %v1389, 24
      %v1401 = vpop.permute.xlu0 %1400
      %1402 = vrot.lane.b32.xlu0 %v1391, 24
      %v1403 = vpop.permute.xlu0 %1402
      %1404 = vrot.lane.b32.xlu0 %v1393, 24
      %v1405 = vpop.permute.xlu0 %1404
      %1406 = vrot.lane.b32.xlu0 %v1395, 24
      %v1407 = vpop.permute.xlu0 %1406
      %1408 = vrot.lane.b32.xlu0 %v1397, 24
      %v1409 = vpop.permute.xlu0 %1408
      %1410 = vrot.lane.b32.xlu0 %v1399, 24
      %v1411 = vpop.permute.xlu0 %1410
      %vm1412 = vsmask.f32 256
      %v1413 = vrot.slane %v1324, 7
      %v1414 = vor.u32 %v1413, %v1327
      %v1415 = vrot.slane %v1332, 7
      %v1416 = vor.u32 %v1415, %v1335
      %v1417 = vsel %vm1412, %v1413, %v1416
      %v1418 = vrot.slane %v1341, 7
      %v1419 = vor.u32 %v1418, %v1344
      %v1420 = vsel %vm1412, %v1415, %v1419
      %v1421 = vrot.slane %v1350, 7
      %v1422 = vor.u32 %v1421, %v1353
      %v1423 = vsel %vm1412, %v1418, %v1422
      %v1424 = vrot.slane %v1359, 7
      %v1425 = vor.u32 %v1424, %v1362
      %v1426 = vsel %vm1412, %v1421, %v1425
      %v1427 = vrot.slane %v1368, 7
      %v1428 = vor.u32 %v1427, %v1371
      %v1429 = vsel %vm1412, %v1424, %v1428
      %1430 = vrot.lane.b32.xlu0 %v1414, 28
      %v1431 = vpop.permute.xlu0 %1430
      %1432 = vrot.lane.b32.xlu0 %v1417, 28
      %v1433 = vpop.permute.xlu0 %1432
      %1434 = vrot.lane.b32.xlu0 %v1420, 28
      %v1435 = vpop.permute.xlu0 %1434
      %1436 = vrot.lane.b32.xlu0 %v1423, 28
      %v1437 = vpop.permute.xlu0 %1436
      %1438 = vrot.lane.b32.xlu0 %v1426, 28
      %v1439 = vpop.permute.xlu0 %1438
      %1440 = vrot.lane.b32.xlu0 %v1429, 28
      %v1441 = vpop.permute.xlu0 %1440
      %v1443 = vunpack.c.l.b16 %v409
      %v1444 = vpack.c.b16 %v1316, %v1248
      %v1445 = vpack.c.b16 %v1443, %v1443
      %v1446 = vrot.slane %v1200, 7
      %v1447 = vor.u32 %v1446, %v1203
      %v1448 = vrot.slane %v1209, 7
      %v1449 = vor.u32 %v1448, %v1212
      %v1450 = vsel %vm1412, %v1446, %v1449
      %v1451 = vrot.slane %v1218, 7
      %v1452 = vor.u32 %v1451, %v1221
      %v1453 = vsel %vm1412, %v1448, %v1452
      %v1454 = vrot.slane %v1227, 7
      %v1455 = vor.u32 %v1454, %v1230
      %v1456 = vsel %vm1412, %v1451, %v1455
      %v1458 = vshrl.u32 %v1444, 16
      %v1460 = vrot.slane %v1458, 7
      %v1461 = vshll.u32 %v1444, 16
      %v1463 = vor.u32 %v1460, %v1461
      %v1464 = vsel %vm1412, %v1454, %v1463
      %v1466 = vshrl.u32 %v1445, 16
      %v1468 = vrot.slane %v1466, 7
      %v1469 = vshll.u32 %v1445, 16
      %v1471 = vor.u32 %v1468, %v1469
      %v1472 = vsel %vm1412, %v1460, %v1471
      %1473 = vrot.lane.b32.xlu0 %v1447, 32
      %v1474 = vpop.permute.xlu0 %1473
      %1475 = vrot.lane.b32.xlu0 %v1450, 32
      %v1476 = vpop.permute.xlu0 %1475
      %1477 = vrot.lane.b32.xlu0 %v1453, 32
      %v1478 = vpop.permute.xlu0 %1477
      %1479 = vrot.lane.b32.xlu0 %v1456, 32
      %v1480 = vpop.permute.xlu0 %1479
      %1481 = vrot.lane.b32.xlu0 %v1464, 32
      %v1482 = vpop.permute.xlu0 %1481
      %1483 = vrot.lane.b32.xlu0 %v1472, 32
      %v1484 = vpop.permute.xlu0 %1483
      %1485 = vrot.lane.b32.xlu0 %v1186, 36
      %v1486 = vpop.permute.xlu0 %1485
      %1487 = vrot.lane.b32.xlu0 %v1187, 36
      %v1488 = vpop.permute.xlu0 %1487
      %1489 = vrot.lane.b32.xlu0 %v1188, 36
      %v1490 = vpop.permute.xlu0 %1489
      %1491 = vrot.lane.b32.xlu0 %v1189, 36
      %v1492 = vpop.permute.xlu0 %1491
      %1493 = vrot.lane.b32.xlu0 %v1444, 36
      %v1494 = vpop.permute.xlu0 %1493
      %1495 = vrot.lane.b32.xlu0 %v1445, 36
      %v1496 = vpop.permute.xlu0 %1495
      %v1497 = vrot.slane %v1203, 1
      %v1498 = vor.u32 %v1200, %v1497
      %v1499 = vrot.slane %v1212, 1
      %v1500 = vsel %vm438, %v1498, %v1499
      %v1501 = vor.u32 %v1209, %v1499
      %v1502 = vrot.slane %v1221, 1
      %v1503 = vsel %vm438, %v1501, %v1502
      %v1504 = vor.u32 %v1218, %v1502
      %v1505 = vrot.slane %v1230, 1
      %v1506 = vsel %vm438, %v1504, %v1505
      %v1507 = vor.u32 %v1227, %v1505
      %v1508 = vrot.slane %v1461, 1
      %v1509 = vsel %vm438, %v1507, %v1508
      %v1510 = vor.u32 %v1458, %v1508
      %v1511 = vrot.slane %v1469, 1
      %v1512 = vsel %vm438, %v1510, %v1511
      %v1513 = vor.u32 %v1466, %v1511
      %1514 = vrot.lane.b32.xlu0 %v1500, 40
      %v1515 = vpop.permute.xlu0 %1514
      %1516 = vrot.lane.b32.xlu0 %v1503, 40
      %v1517 = vpop.permute.xlu0 %1516
      %1518 = vrot.lane.b32.xlu0 %v1506, 40
      %v1519 = vpop.permute.xlu0 %1518
      %1520 = vrot.lane.b32.xlu0 %v1509, 40
      %v1521 = vpop.permute.xlu0 %1520
      %1522 = vrot.lane.b32.xlu0 %v1512, 40
      %v1523 = vpop.permute.xlu0 %1522
      %1524 = vrot.lane.b32.xlu0 %v1513, 40
      %v1525 = vpop.permute.xlu0 %1524
      %v1527 = vsel %vm972, %v742, %v1154
      %v1529 = vsel %vm972, %v743, %v1156
      %v1531 = vsel %vm972, %v744, %v1158
      %v1533 = vsel %vm972, %v745, %v1160
      %v1535 = vsel %vm972, %v949, %v1162
      %v1537 = vsel %vm972, %v950, %v1164
      %v1539 = vsel %vm983, %v1527, %v1236
      %v1541 = vsel %vm983, %v1529, %v1238
      %v1543 = vsel %vm983, %v1531, %v1240
      %v1545 = vsel %vm983, %v1533, %v1242
      %v1547 = vsel %vm983, %v1535, %v1244
      %v1549 = vsel %vm983, %v1537, %v1246
      %v1551 = vsel %vm994, %v1539, %v1263
      %v1553 = vsel %vm994, %v1541, %v1265
      %v1555 = vsel %vm994, %v1543, %v1267
      %v1557 = vsel %vm994, %v1545, %v1269
      %v1559 = vsel %vm994, %v1547, %v1271
      %v1561 = vsel %vm994, %v1549, %v1273
      %v1563 = vsel %vm1005, %v1551, %v1304
      %v1565 = vsel %vm1005, %v1553, %v1306
      %v1567 = vsel %vm1005, %v1555, %v1308
      %v1569 = vsel %vm1005, %v1557, %v1310
      %v1571 = vsel %vm1005, %v1559, %v1312
      %v1573 = vsel %vm1005, %v1561, %v1314
      %v1575 = vsel %vm1016, %v1563, %v1377
      %v1577 = vsel %vm1016, %v1565, %v1379
      %v1579 = vsel %vm1016, %v1567, %v1381
      %v1581 = vsel %vm1016, %v1569, %v1383
      %v1583 = vsel %vm1016, %v1571, %v1385
      %v1585 = vsel %vm1016, %v1573, %v1387
      %v1587 = vsel %vm1027, %v1575, %v1401
      %v1589 = vsel %vm1027, %v1577, %v1403
      %v1591 = vsel %vm1027, %v1579, %v1405
      %v1593 = vsel %vm1027, %v1581, %v1407
      %v1595 = vsel %vm1027, %v1583, %v1409
      %v1597 = vsel %vm1027, %v1585, %v1411
      %v1599 = vsel %vm1038, %v1587, %v1431
      %v1601 = vsel %vm1038, %v1589, %v1433
      %v1603 = vsel %vm1038, %v1591, %v1435
      %v1605 = vsel %vm1038, %v1593, %v1437
      %v1607 = vsel %vm1038, %v1595, %v1439
      %v1609 = vsel %vm1038, %v1597, %v1441
      %v1611 = vsel %vm1049, %v1599, %v1474
      %v1613 = vsel %vm1049, %v1601, %v1476
      %v1615 = vsel %vm1049, %v1603, %v1478
      %v1617 = vsel %vm1049, %v1605, %v1480
      %v1619 = vsel %vm1049, %v1607, %v1482
      %v1621 = vsel %vm1049, %v1609, %v1484
      %v1623 = vsel %vm1060, %v1611, %v1486
      %v1625 = vsel %vm1060, %v1613, %v1488
      %v1627 = vsel %vm1060, %v1615, %v1490
      %v1629 = vsel %vm1060, %v1617, %v1492
      %v1631 = vsel %vm1060, %v1619, %v1494
      %v1633 = vsel %vm1060, %v1621, %v1496
      %v1635 = vsel %vm1071, %v1623, %v1515
      %v1637 = vsel %vm1071, %v1625, %v1517
      %v1639 = vsel %vm1071, %v1627, %v1519
      %v1641 = vsel %vm1071, %v1629, %v1521
      %v1643 = vsel %vm1071, %v1631, %v1523
      %v1645 = vsel %vm1071, %v1633, %v1525
      %v1646 = vshrl.u32 %v1635, 16
      %v1648 = vrot.slane %v1646, 2
      %v1649 = vshll.u32 %v1635, 16
      %v1651 = vrot.slane %v1649, 3
      %v1652 = vor.u32 %v1648, %v1651
      %v1653 = vshrl.u32 %v1637, 16
      %v1655 = vrot.slane %v1653, 2
      %v1656 = vshll.u32 %v1637, 16
      %v1658 = vrot.slane %v1656, 3
      %v1659 = vor.u32 %v1655, %v1658
      %v1660 = vsel %vm655, %v1652, %v1659
      %v1661 = vshrl.u32 %v1639, 16
      %v1663 = vrot.slane %v1661, 2
      %v1664 = vshll.u32 %v1639, 16
      %v1666 = vrot.slane %v1664, 3
      %v1667 = vor.u32 %v1663, %v1666
      %v1668 = vsel %vm655, %v1659, %v1667
      %v1669 = vshrl.u32 %v1641, 16
      %v1671 = vrot.slane %v1669, 2
      %v1672 = vshll.u32 %v1641, 16
      %v1674 = vrot.slane %v1672, 3
      %v1675 = vor.u32 %v1671, %v1674
      %v1676 = vsel %vm655, %v1667, %v1675
      %v1677 = vshrl.u32 %v1643, 16
      %v1679 = vrot.slane %v1677, 2
      %v1680 = vshll.u32 %v1643, 16
      %v1682 = vrot.slane %v1680, 3
      %v1683 = vor.u32 %v1679, %v1682
      %v1684 = vsel %vm655, %v1675, %v1683
      %v1685 = vshrl.u32 %v1645, 16
      %v1687 = vrot.slane %v1685, 2
      %v1688 = vshll.u32 %v1645, 16
      %v1690 = vrot.slane %v1688, 3
      %v1691 = vor.u32 %v1687, %v1690
      %v1692 = vsel %vm655, %v1683, %v1691
      %1693 = vrot.lane.b32.xlu0 %v1660, 64
      %v1694 = vpop.permute.xlu0 %1693
      %1695 = vrot.lane.b32.xlu0 %v1668, 64
      %v1696 = vpop.permute.xlu0 %1695
      %1697 = vrot.lane.b32.xlu0 %v1676, 64
      %v1698 = vpop.permute.xlu0 %1697
      %1699 = vrot.lane.b32.xlu0 %v1684, 64
      %v1700 = vpop.permute.xlu0 %1699
      %1701 = vrot.lane.b32.xlu0 %v1692, 64
      %v1702 = vpop.permute.xlu0 %1701
      %vm1703 = vcmask 523264
      %v1705 = vsel %vm1703, %v1128, %v1694
      %v1707 = vsel %vm1703, %v1130, %v1696
      %v1709 = vsel %vm1703, %v1132, %v1698
      %v1711 = vsel %vm1703, %v1134, %v1700
      %v1713 = vsel %vm1703, %v1136, %v1702
      %v1714 = vld [vmem:[%s3] sm:$0xf]
      %v1715 = vld [vmem:[%s3 + $0x4] sm:$0xf]
      %v1716 = vld [vmem:[%s3 + $0x8] sm:$0xf]
      %v1717 = vld [vmem:[%s3 + $0xc] sm:$0xf]
      %v1718 = vld [vmem:[%s3 + $0x10] sm:$0xf]
      %v1719 = vld [vmem:[%s3 + $0x14] sm:$0xf]
      %v1720 = vld [vmem:[%s3 + $0x18] sm:$0xf]
      %v1721 = vld [vmem:[%s3 + $0x1c] sm:$0xf]
      %v1722 = vld [vmem:[%s3 + $0x20] sm:$0xf]
      %v1723 = vld [vmem:[%s3 + $0x24] sm:$0xf]
      %v1724 = vld [vmem:[%s3 + $0x28] sm:$0xf]
      %v1725 = vld [vmem:[%s3 + $0x2c] sm:$0xf]
      %v1726 = vld [vmem:[%s3 + $0x30] sm:$0xf]
      %v1727 = vld [vmem:[%s3 + $0x34] sm:$0x3]
      %v1728 = vld [vmem:[%s4] sm:$0x1]
      %v1730 = vlaneseq
      %v1731 = vshrl.u32 %v1730, 7
      %v1732 = vsub.s32 0, %v1731
      %v1733 = vrot.slane %v1728, %v1732
      %v1749 = vunpack.c.l.b16 %v1714
      %v1750 = vunpack.c.l.b16 %v1715
      %v1751 = vunpack.c.l.b16 %v1716
      %v1752 = vunpack.c.l.b16 %v1717
      %v1753 = vunpack.c.l.b16 %v1718
      %v1754 = vunpack.c.l.b16 %v1719
      %v1755 = vunpack.c.l.b16 %v1720
      %v1756 = vunpack.c.l.b16 %v1721
      %v1757 = vunpack.c.l.b16 %v1722
      %v1758 = vunpack.c.l.b16 %v1723
      %v1759 = vunpack.c.l.b16 %v1724
      %v1760 = vunpack.c.l.b16 %v1725
      %v1761 = vunpack.c.l.b16 %v1726
      %v1762 = vunpack.c.l.b16 %v1727
      %v1763 = vpack.c.b16 %v1750, %v1749
      %v1764 = vpack.c.b16 %v1752, %v1751
      %v1765 = vpack.c.b16 %v1754, %v1753
      %v1766 = vpack.c.b16 %v1756, %v1755
      %v1767 = vpack.c.b16 %v1758, %v1757
      %v1768 = vpack.c.b16 %v1760, %v1759
      %v1769 = vpack.c.b16 %v1762, %v1761
      %vm1776 = vcmask 883712
      %v1777 = vsel %vm1776, %v1705, 0
      %v1779 = vsel %vm1776, %v1707, 0
      %v1781 = vsel %vm1776, %v1709, 0
      %v1783 = vsel %vm1776, %v1711, 0
      %v1785 = vsel %vm1776, %v1713, 0
      %vm1787 = vcmask 1045504
      %v1789 = vsel %vm1787, %v1769, 0
      %1791 = vmatprep.subr.bf16.mxu0 0
      %1792 = vmatpush1.bf16.msra.mxu0 %v1763
      %1793 = vmatprep.subr.bf16.mxu0 0
      %1794 = vmatpush1.bf16.msra.mxu0 %v1764
      %1795 = vmatprep.subr.bf16.mxu0 0
      %1796 = vmatpush1.bf16.msra.mxu0 %v1765
      %1797 = vmatprep.subr.bf16.mxu0 0
      %1798 = vmatpush1.bf16.msra.mxu0 %v1766
      %1799 = vmatprep.subr.bf16.mxu0 0
      %1800 = vmatpush1.bf16.msra.mxu0 %v1767
      %1801 = vmatprep.subr.bf16.mxu0 0
      %1802 = vmatpush1.bf16.msra.mxu0 %v1768
      %1803 = vmatprep.subr.bf16.mxu0 0
      %1804 = vmatpush1.bf16.msra.mxu0 %v1789
      %1805 = vmatprep.subr.bf16.mxu0 0
      %1806 = vmatpush1.bf16.msra.mxu0 0
      %1807 = vmatprep.subr.bf16.mxu0 0
      %1808 = vmatpush1.bf16.msra.mxu0 0
      %1809 = vmatprep.subr.bf16.mxu0 0
      %1810 = vmatpush1.bf16.msra.mxu0 0
      %1811 = vmatprep.subr.bf16.mxu0 0
      %1812 = vmatpush1.bf16.msra.mxu0 0
      %1813 = vmatprep.subr.bf16.mxu0 0
      %1814 = vmatpush1.bf16.msra.mxu0 0
      %1815 = vmatprep.subr.bf16.mxu0 0
      %1816 = vmatpush1.bf16.msra.mxu0 0
      %1817 = vmatprep.subr.bf16.mxu0 0
      %1818 = vmatpush1.bf16.msra.mxu0 0
      %1819 = vmatprep.subr.bf16.mxu0 0
      %1820 = vmatpush1.bf16.msra.mxu0 0
      %1821 = vmatprep.subr.bf16.mxu0 0
      %1822 = vmatpush1.bf16.msra.mxu0 0
      %1823 = vmatprep.mubr.bf16.mxu0 0
      %1824 = vmatmul.mubr.bf16.gmra.mrb[0].mxu0 %v1777
      %v1825 = vpop.f32.mrb[0].mxu0
      %v1826 = vadd.f32 %v1733, %v1825
      %v1827 = vpop.f32.mrb[0].mxu0
      %v1828 = vpop.f32.mrb[0].mxu0
      %v1829 = vadd.f32 %v1733, %v1828
      %v1830 = vpop.f32.mrb[0].mxu0
      %1831 = vmatprep.mubr.bf16.mxu0 0
      %1832 = vmatmul.mubr.bf16.gmra.mrb[0].mxu0 %v1779
      %v1833 = vpop.f32.mrb[0].mxu0
      %v1834 = vadd.f32 %v1733, %v1833
      %v1835 = vpop.f32.mrb[0].mxu0
      %v1836 = vpop.f32.mrb[0].mxu0
      %v1837 = vadd.f32 %v1733, %v1836
      %v1838 = vpop.f32.mrb[0].mxu0
      %1839 = vmatprep.mubr.bf16.mxu0 0
      %1840 = vmatmul.mubr.bf16.gmra.mrb[0].mxu0 %v1781
      %v1841 = vpop.f32.mrb[0].mxu0
      %v1842 = vadd.f32 %v1733, %v1841
      %v1843 = vpop.f32.mrb[0].mxu0
      %v1844 = vpop.f32.mrb[0].mxu0
      %v1845 = vadd.f32 %v1733, %v1844
      %v1846 = vpop.f32.mrb[0].mxu0
      %1847 = vmatprep.mubr.bf16.mxu0 0
      %1848 = vmatmul.mubr.bf16.gmra.mrb[0].mxu0 %v1783
      %v1849 = vpop.f32.mrb[0].mxu0
      %v1850 = vadd.f32 %v1733, %v1849
      %v1851 = vpop.f32.mrb[0].mxu0
      %v1852 = vpop.f32.mrb[0].mxu0
      %v1853 = vadd.f32 %v1733, %v1852
      %v1854 = vpop.f32.mrb[0].mxu0
      %1855 = vmatprep.mubr.bf16.mxu0 0
      %1856 = vmatmul.mubr.bf16.gmra.mrb[0].mxu0 %v1785
      %v1857 = vpop.f32.mrb[0].mxu0
      %v1858 = vadd.f32 %v1733, %v1857
      %v1859 = vpop.f32.mrb[0].mxu0
      %v1860 = vpop.f32.mrb[0].mxu0
      %v1861 = vadd.f32 %v1733, %v1860
      %v1862 = vpop.f32.mrb[0].mxu0
      %1863 = vdwg.mxu0
      %v1864 = vmax.f32 %v1826, 0.0
      %v1865 = vmax.f32 %v1829, 0.0
      %v1866 = vmax.f32 %v1834, 0.0
      %v1867 = vmax.f32 %v1837, 0.0
      %v1868 = vmax.f32 %v1842, 0.0
      %v1869 = vmax.f32 %v1845, 0.0
      %v1870 = vmax.f32 %v1850, 0.0
      %v1871 = vmax.f32 %v1853, 0.0
      %v1872 = vmax.f32 %v1858, 0.0
      %v1873 = vmax.f32 %v1861, 0.0
      %1874 = vst.msk [vmem:[%s359] sm:$0xff] %vm983, %v1864
      %1875 = vst.msk [vmem:[%s359 + $0x8] sm:$0xff] %vm983, %v1865
      %1876 = vst.msk [vmem:[%s359 + $0x10] sm:$0xff] %vm983, %v1866
      %1877 = vst.msk [vmem:[%s359 + $0x18] sm:$0xff] %vm983, %v1867
      %1878 = vst.msk [vmem:[%s359 + $0x20] sm:$0xff] %vm983, %v1868
      %1879 = vst.msk [vmem:[%s359 + $0x28] sm:$0xff] %vm983, %v1869
      %1880 = vst.msk [vmem:[%s359 + $0x30] sm:$0xff] %vm983, %v1870
      %1881 = vst.msk [vmem:[%s359 + $0x38] sm:$0xff] %vm983, %v1871
      %1882 = vst.msk [vmem:[%s359 + $0x40] sm:$0xff] %vm983, %v1872
      %1883 = vst.msk [vmem:[%s359 + $0x48] sm:$0xff] %vm983, %v1873
      %s1884 = smul.u32 10, %s23
      %p1885 = scmp.lt.s32.totalorder %s21, 1
      %s1886 = scalar_select %p1885, %s21, 1
      %p1887 = scmp.lt.s32.totalorder %s22, 7
      %s1888 = scalar_select %p1887, %s22, 7
      %p1889 = scmp.lt.s32.totalorder %s1884, 9
      %s1890 = scalar_select %p1889, %s1884, 9
      %s1891 = smul.addr %s1888, 10
      %s1892 = sadd.s32 %s1890, %s1891
      %s1893 = smul.addr %s1886, 80
      %s1894 = sadd.s32 %s1892, %s1893
      %s1895 = smul.addr %s1894, 8
      %s1896 = scalar_lea.vmem %s5, %s1895
      // Predicated region
      $region41: #{conv3d_block_forward.1} parent=39 // pred_check
        %p1897 = pneg %p187
      $region42: #{conv3d_block_forward.1} parent=39 // pred_check_branch
        %1899 = sbr.rel (%p1897) target = $region44
      $region43: #{conv3d_block_forward.1} parent=39 // pred_region
        %s1900 = smul.u32 10, %s23
      $region44: #{conv3d_block_forward.1} parent=39 // pred_fallthru
        _
    $region40: #{conv3d_block_forward.1} parent=5 // pred_fallthru
      _
    %p1901 = scmp.le.s32.totalorder 2, %s11
    // Predicated region
    $region45: #{conv3d_block_forward.1} parent=5 // pred_check
      %p1902 = pneg %p1901
    $region46: #{conv3d_block_forward.1} parent=5 // pred_check_branch
      %1904 = sbr.rel (%p1902) target = $region48
    $region47: #{conv3d_block_forward.1} parent=5 // pred_region
      %s1905 = ssub.s32 %s11, 2
      // Predicated region
      $region49: #{conv3d_block_forward.1} parent=47 // pred_check
        %p1906 = pneg %p193
      $region50: #{conv3d_block_forward.1} parent=47 // pred_check_branch
        %1908 = sbr.rel (%p1906) target = $region52
      $region51: #{conv3d_block_forward.1} parent=47 // pred_region
        %s1909 = smul.u32 10, %s26
        %p1910 = scmp.lt.s32.totalorder %s24, 1
        %s1911 = scalar_select %p1910, %s24, 1
        %p1912 = scmp.lt.s32.totalorder %s25, 7
        %s1913 = scalar_select %p1912, %s25, 7
        %p1914 = scmp.lt.s32.totalorder %s1909, 9
        %s1915 = scalar_select %p1914, %s1909, 9
        %s1916 = smul.addr %s1913, 10
        %s1917 = sadd.s32 %s1915, %s1916
        %s1918 = smul.addr %s1911, 80
        %s1919 = sadd.s32 %s1917, %s1918
        %s1920 = smul.addr %s1919, 8
        %s1921 = scalar_lea.vmem %s5, %s1920
      $region52: #{conv3d_block_forward.1} parent=47 // pred_fallthru
        _
    $region48: #{conv3d_block_forward.1} parent=5 // pred_fallthru
      _
  $region6: #{conv3d_block_forward.1} parent=0 // loop_footer
    %s15 = sadd.s32 1, %s11
  $region7: #{conv3d_block_forward.1} parent=0 // loop_footer_branch
    %10 = sbr.rel target = $region3
  $region8: #{conv3d_block_forward.1} parent=0 // loop_exit
    _

</llo_original>
